<compile_context>
chip_gen: v7x
topology: tpu7x:2x2x1
jax: 0.10.0
libtpu: 0.0.40
codegen_flags: <defaults>
</compile_context>

<pallas_src>
import functools

import jax
import jax.numpy as jnp
from jax import lax
from jax.experimental import pallas as pl
from jax.experimental.pallas import tpu as pltpu


def _round_up(v, m):
    return (v + m - 1) // m * m


def _pick_lane_tile(Lp, B):
    """Lane-tile width: multiple of 128 dividing Lp, <=512, preferring >=8 grid steps."""
    cands = [t for t in range(128, min(Lp, 512) + 1, 128) if Lp % t == 0]
    good = [t for t in cands if B * (Lp // t) >= 8]
    return max(good) if good else max(cands)


def _make_kernel(n_out_p, K, dil, pad, T):
    W1 = T + pad          # stage-1 width: output tile + pad columns of history

    def kernel(x_ref, w1_ref, w2_ref, wg2_ref, b1_ref, b2_ref, bg2_ref, out_ref):
        g = pl.program_id(1)                     # lane-tile index in the sequence
        xall = x_ref[0, 0]                       # (2*n_in, T + 2*pad) halo'd input

        # ---- stage 1: conv1 | convgate1 | 1x1 residual, per-tap accumulation ----
        acc1 = jnp.dot(w1_ref[0], xall[:, 0:W1],
                       preferred_element_type=jnp.float32)
        for j in range(1, K):
            acc1 = acc1 + jnp.dot(w1_ref[j], xall[:, j * dil:j * dil + W1],
                                  preferred_element_type=jnp.float32)
        y1 = acc1 + b1_ref[...]                  # lane-broadcast bias add (VPU)

        h1 = y1[0:n_out_p, :]
        g1 = y1[n_out_p:2 * n_out_p, :]
        res = y1[2 * n_out_p:, :]                # residual path (width W1)
        gated = h1 * jax.nn.sigmoid(g1)          # dropout1: identity (inference)

        # Zero stage-1 history columns at negative times (only the first tile of
        # each sequence has any): one (1, W1) iota + compare, sublane-broadcast.
        lane = lax.broadcasted_iota(jnp.int32, (1, W1), 1)
        keep = lane >= (pad - g * T)
        gated = jnp.where(keep, gated, 0.0)
        g1 = jnp.where(keep, g1, 0.0)

        # ---- stage 2: conv2 / convgate2 as separate per-tap accumulations ----
        acc_h = jnp.dot(w2_ref[0], gated[:, 0:T],
                        preferred_element_type=jnp.float32)
        acc_g = jnp.dot(wg2_ref[0], g1[:, 0:T],
                        preferred_element_type=jnp.float32)
        for j in range(1, K):
            acc_h = acc_h + jnp.dot(w2_ref[j], gated[:, j * dil:j * dil + T],
                                    preferred_element_type=jnp.float32)
            acc_g = acc_g + jnp.dot(wg2_ref[j], g1[:, j * dil:j * dil + T],
                                    preferred_element_type=jnp.float32)
        h2 = acc_h + b2_ref[...]
        g2 = acc_g + bg2_ref[...]
        # dropout2: identity (inference)
        out = h2 * jax.nn.sigmoid(g2) + res[:, pad:pad + T]
        out_ref[0] = out.astype(out_ref.dtype)

    return kernel


def prepare_params(params):
    """Hoisted (per-model, not per-call) weight preprocessing: per-tap fused
    weight blocks and bias columns, with n_out padded to a sublane multiple."""
    f32 = jnp.float32
    n_out, n_in, K = params["w1"].shape
    n_out_p = _round_up(n_out, 8)

    w1 = jnp.transpose(params["w1"].astype(f32), (2, 0, 1))    # (K, n_out, n_in)
    wg1 = jnp.transpose(params["wg1"].astype(f32), (2, 0, 1))
    w2 = jnp.transpose(params["w2"].astype(f32), (2, 0, 1))    # (K, n_out, n_out)
    wg2 = jnp.transpose(params["wg2"].astype(f32), (2, 0, 1))

    # Stage-1 per-tap weight, output rows [h1 ; g1 ; res], input cols [x0 | x1].
    w1taps = jnp.zeros((K, 3 * n_out_p, 2 * n_in), f32)
    w1taps = w1taps.at[:, 0:n_out, 0:n_in].set(w1)
    w1taps = w1taps.at[:, n_out_p:n_out_p + n_out, n_in:2 * n_in].set(wg1)
    # residual 1x1 conv uses the undelayed x0 == tap K-1 (since pad = (K-1)*dil)
    w1taps = w1taps.at[K - 1, 2 * n_out_p:2 * n_out_p + n_out, 0:n_in].set(
        params["wds"].astype(f32))

    b1big = jnp.zeros((3 * n_out_p,), f32)
    b1big = b1big.at[0:n_out].set(params["b1"].astype(f32))
    b1big = b1big.at[n_out_p:n_out_p + n_out].set(params["bg1"].astype(f32))
    b1big = b1big.at[2 * n_out_p:2 * n_out_p + n_out].set(params["bds"].astype(f32))

    # Stage-2 per-tap weights: conv2 and convgate2 kept separate (no zero blocks).
    def pad_taps(w):
        z = jnp.zeros((K, n_out_p, n_out_p), f32)
        return z.at[:, 0:n_out, 0:n_out].set(w)

    def pad_bias(b):
        return jnp.zeros((n_out_p,), f32).at[0:n_out].set(b.astype(f32)).reshape(-1, 1)

    return dict(
        w1taps=w1taps,
        w2taps=pad_taps(w2),
        wg2taps=pad_taps(wg2),
        b1col=b1big.reshape(-1, 1),
        b2col=pad_bias(params["b2"]),
        bg2col=pad_bias(params["bg2"]),
    )


def gated_temporal_block_last_sep(x, prep, *, n_outputs, kernel_size, dilation,
                                  padding):
    """x: (B, 2*n_inputs, L) float  ->  (B, n_outputs, L). Inference forward."""
    B, C2, L = x.shape
    n_in = C2 // 2
    K, dil, pad = kernel_size, dilation, padding
    n_out = n_outputs
    # Conv1d(padding=p) + Chomp1d(p) with a shape-consistent residual requires the
    # standard TCN setting p = (K-1)*dilation; stride is assumed to be 1.
    assert pad == (K - 1) * dil and pad >= 1
    n_out_p = prep["w2taps"].shape[1]
    assert prep["w1taps"].shape == (K, 3 * n_out_p, 2 * n_in)

    f32 = jnp.float32
    out_dtype = x.dtype
    x = x.astype(f32)

    # ---- lane-tile the time axis; each tile carries 2*pad columns of history ----
    Lp = _round_up(L, 128)
    T = _pick_lane_tile(Lp, B)
    nt = Lp // T
    H = 2 * pad

    xpad = jnp.pad(x, ((0, 0), (0, 0), (H, Lp - L)))   # causal zeros + tail pad
    # (B, nt, 2*n_in, T+H): halo duplication costs only ~H/T extra input bytes
    # (vs ~K x for a full wrapper-side im2col).
    xin = jnp.stack([xpad[:, :, g * T:g * T + T + H] for g in range(nt)], axis=1)

    kern = _make_kernel(n_out_p, K, dil, pad, T)

    def resident(shape):                      # whole-array block, fetched once
        n = len(shape)
        return pl.BlockSpec(shape, lambda b, g: (0,) * n)

    w_bytes = 4 * sum(int(v.size) for v in prep.values())
    need = (2 * (2 * n_in * (T + H) * 4) + 2 * (n_out_p * T * 4)
            + w_bytes + (8 << 20))
    vmem_limit = int(min(max(need, 32 << 20), 100 << 20))

    out3d = pl.pallas_call(
        kern,
        out_shape=jax.ShapeDtypeStruct((B, n_out_p, Lp), f32),
        grid_spec=pltpu.PrefetchScalarGridSpec(
            num_scalar_prefetch=0,
            grid=(B, nt),
            in_specs=[
                pl.BlockSpec((1, 1, 2 * n_in, T + H), lambda b, g: (b, g, 0, 0)),
                resident(prep["w1taps"].shape),
                resident(prep["w2taps"].shape),
                resident(prep["wg2taps"].shape),
                resident(prep["b1col"].shape),
                resident(prep["b2col"].shape),
                resident(prep["bg2col"].shape),
            ],
            out_specs=pl.BlockSpec((1, n_out_p, T), lambda b, g: (b, 0, g)),
        ),
        compiler_params=pltpu.CompilerParams(
            dimension_semantics=("parallel", "parallel"),
            vmem_limit_bytes=vmem_limit),
    )(xin, prep["w1taps"], prep["w2taps"], prep["wg2taps"],
      prep["b1col"], prep["b2col"], prep["bg2col"])

    # Output already in (B, channels, L) layout: no full-tensor transpose.
    out = out3d[:, :n_out, :L]
    return out.astype(out_dtype)


def init_params(key, n_in, n_out, K):
    """Deterministic synthetic parameters matching the module's init_weights()."""
    ks = jax.random.split(key, 10)

    def weight_norm_w(k, c_out, c_in, ksz, std):
        v = std * jax.random.normal(k, (c_out, c_in, ksz), jnp.float32)
        # weight_norm with default init g = ||v||_2 reproduces W == v exactly.
        norm = jnp.sqrt(jnp.sum(v * v, axis=(1, 2), keepdims=True))
        return norm * v / norm

    def bias(k, c_out, fan_in):
        bound = 1.0 / (fan_in ** 0.5)
        return jax.random.uniform(k, (c_out,), jnp.float32, -bound, bound)

    params = dict(
        w1=weight_norm_w(ks[0], n_out, n_in, K, 0.01),
        wg1=weight_norm_w(ks[1], n_out, n_in, K, 0.01),
        w2=weight_norm_w(ks[2], n_out, n_out, K, 0.01),
        wg2=weight_norm_w(ks[3], n_out, n_out, K, 0.01),
        b1=bias(ks[4], n_out, n_in * K),
        bg1=bias(ks[5], n_out, n_in * K),
        b2=bias(ks[6], n_out, n_out * K),
        bg2=bias(ks[7], n_out, n_out * K),
    )
    if n_in != n_out:
        params["wds"] = 0.1 * jax.random.normal(ks[8], (n_out, n_in), jnp.float32)
        params["bds"] = bias(ks[9], n_out, n_in)
    else:  # downsample is None -> residual passthrough as identity 1x1 conv
        params["wds"] = jnp.eye(n_out, dtype=jnp.float32)
        params["bds"] = jnp.zeros((n_out,), jnp.float32)
    return params


# ---- plain-JAX reference (independent check of the Pallas kernel) ----
def _causal_conv_ref(x, w, b, dilation, padding):
    y = lax.conv_general_dilated(
        x, w, window_strides=(1,), padding=[(padding, padding)],
        rhs_dilation=(dilation,), dimension_numbers=("NCH", "OIH", "NCH"))
    y = y[:, :, :-padding]  # Chomp1d
    return y + b[None, :, None]


def reference(x, params, *, dilation, padding):
    n_in = x.shape[1] // 2
    x0, x1 = x[:, :n_in], x[:, n_in:]
    h = _causal_conv_ref(x0, params["w1"], params["b1"], dilation, padding)
    g = _causal_conv_ref(x1, params["wg1"], params["bg1"], dilation, padding)
    h = h * jax.nn.sigmoid(g)
    g2 = _causal_conv_ref(g, params["wg2"], params["bg2"], dilation, padding)
    h2 = _causal_conv_ref(h, params["w2"], params["b2"], dilation, padding)
    out = h2 * jax.nn.sigmoid(g2)
    res = jnp.einsum("oi,bil->bol", params["wds"], x0) + params["bds"][None, :, None]
    return out + res


if __name__ == "__main__":
    configs = [
        dict(n_in=4, n_out=8, K=3, dil=2, B=2, L=128),    # baseline, single tile
        dict(n_in=4, n_out=8, K=3, dil=2, B=2, L=1024),   # multi lane-tile + halo path
        dict(n_in=3, n_out=5, K=2, dil=1, B=3, L=200),    # unaligned channels / length
    ]
    key = jax.random.PRNGKey(0)
    for i, cfg in enumerate(configs):
        key, kx, kp = jax.random.split(key, 3)
        pad = (cfg["K"] - 1) * cfg["dil"]
        # forward uses x.chunk(2, dim=1) with conv in_channels == n_inputs,
        # so x must have 2 * n_inputs channels.
        x = jax.random.normal(kx, (cfg["B"], 2 * cfg["n_in"], cfg["L"]), jnp.float32)
        params = init_params(kp, cfg["n_in"], cfg["n_out"], cfg["K"])
        prep = prepare_params(params)          # hoisted out of the per-call path
        fwd = jax.jit(functools.partial(
            gated_temporal_block_last_sep, n_outputs=cfg["n_out"],
            kernel_size=cfg["K"], dilation=cfg["dil"], padding=pad))
        out = jax.block_until_ready(fwd(x, prep))
        ref = reference(x, params, dilation=cfg["dil"], padding=pad)
        assert out.shape == (cfg["B"], cfg["n_out"], cfg["L"])
        assert jnp.allclose(out, ref, atol=1e-4, rtol=1e-4), f"mismatch (config {i})"
    print("KERNEL_OK")
</pallas_src>

<mosaic_0001>
module attributes {stable_mosaic.version = 11 : i64} {
  func.func @kernel(%arg0: i32, %arg1: i32, %arg2: memref<1x1x8x136xf32, #tpu.memory_space<vmem>>, %arg3: memref<3x24x8xf32, #tpu.memory_space<vmem>>, %arg4: memref<3x8x8xf32, #tpu.memory_space<vmem>>, %arg5: memref<3x8x8xf32, #tpu.memory_space<vmem>>, %arg6: memref<24x1xf32, #tpu.memory_space<vmem>>, %arg7: memref<8x1xf32, #tpu.memory_space<vmem>>, %arg8: memref<8x1xf32, #tpu.memory_space<vmem>>, %arg9: memref<1x8x128xf32, #tpu.memory_space<vmem>>) attributes {dimension_semantics = [#tpu.dimension_semantics<parallel>, #tpu.dimension_semantics<parallel>], iteration_bounds = array<i64: 2, 1>, scalar_prefetch = 0 : i64, scratch_operands = 0 : i64, tpu.core_type = #tpu.core_type<tc>, window_params = [{transform_indices = @transform_0, window_bounds = array<i64: 1, 1, 8, 136>}, {pipeline_mode = #tpu.pipeline_mode<synchronous>, transform_indices = @transform_1, window_bounds = array<i64: 3, 24, 8>}, {pipeline_mode = #tpu.pipeline_mode<synchronous>, transform_indices = @transform_2, window_bounds = array<i64: 3, 8, 8>}, {pipeline_mode = #tpu.pipeline_mode<synchronous>, transform_indices = @transform_3, window_bounds = array<i64: 3, 8, 8>}, {pipeline_mode = #tpu.pipeline_mode<synchronous>, transform_indices = @transform_4, window_bounds = array<i64: 24, 1>}, {pipeline_mode = #tpu.pipeline_mode<synchronous>, transform_indices = @transform_5, window_bounds = array<i64: 8, 1>}, {pipeline_mode = #tpu.pipeline_mode<synchronous>, transform_indices = @transform_6, window_bounds = array<i64: 8, 1>}, {transform_indices = @transform_7, window_bounds = array<i64: 1, 8, 128>}]} {
    %c0 = arith.constant 0 : index
    %c0_0 = arith.constant 0 : index
    %c0_1 = arith.constant 0 : index
    %c0_2 = arith.constant 0 : index
    %0 = vector.load %arg2[%c0, %c0_0, %c0_1, %c0_2] : memref<1x1x8x136xf32, #tpu.memory_space<vmem>>, vector<1x1x8x136xf32>
    %1 = vector.shape_cast %0 : vector<1x1x8x136xf32> to vector<8x136xf32>
    %c0_3 = arith.constant 0 : index
    %c0_4 = arith.constant 0 : index
    %c0_5 = arith.constant 0 : index
    %2 = vector.load %arg3[%c0_3, %c0_4, %c0_5] : memref<3x24x8xf32, #tpu.memory_space<vmem>>, vector<1x24x8xf32>
    %3 = vector.shape_cast %2 : vector<1x24x8xf32> to vector<24x8xf32>
    %4 = vector.extract_strided_slice %1 {offsets = [0, 0], sizes = [8, 132], strides = [1, 1]} : vector<8x136xf32> to vector<8x132xf32>
    %cst = arith.constant dense<0.000000e+00> : vector<24x132xf32>
    %5 = tpu.matmul %3, %4, %cst {dimension_numbers = #tpu.dot_dimension_numbers<[1], [0], [0], [1], [0, 0, 1, 1], [], []>} : vector<24x8xf32>, vector<8x132xf32>, vector<24x132xf32> -> vector<24x132xf32>
    %c1 = arith.constant 1 : index
    %c0_6 = arith.constant 0 : index
    %c0_7 = arith.constant 0 : index
    %6 = vector.load %arg3[%c1, %c0_6, %c0_7] : memref<3x24x8xf32, #tpu.memory_space<vmem>>, vector<1x24x8xf32>
    %7 = vector.shape_cast %6 : vector<1x24x8xf32> to vector<24x8xf32>
    %8 = vector.extract_strided_slice %1 {offsets = [0, 2], sizes = [8, 132], strides = [1, 1]} : vector<8x136xf32> to vector<8x132xf32>
    %cst_8 = arith.constant dense<0.000000e+00> : vector<24x132xf32>
    %9 = tpu.matmul %7, %8, %cst_8 {dimension_numbers = #tpu.dot_dimension_numbers<[1], [0], [0], [1], [0, 0, 1, 1], [], []>} : vector<24x8xf32>, vector<8x132xf32>, vector<24x132xf32> -> vector<24x132xf32>
    %10 = arith.addf %5, %9 : vector<24x132xf32>
    %c2 = arith.constant 2 : index
    %c0_9 = arith.constant 0 : index
    %c0_10 = arith.constant 0 : index
    %11 = vector.load %arg3[%c2, %c0_9, %c0_10] : memref<3x24x8xf32, #tpu.memory_space<vmem>>, vector<1x24x8xf32>
    %12 = vector.shape_cast %11 : vector<1x24x8xf32> to vector<24x8xf32>
    %13 = vector.extract_strided_slice %1 {offsets = [0, 4], sizes = [8, 132], strides = [1, 1]} : vector<8x136xf32> to vector<8x132xf32>
    %cst_11 = arith.constant dense<0.000000e+00> : vector<24x132xf32>
    %14 = tpu.matmul %12, %13, %cst_11 {dimension_numbers = #tpu.dot_dimension_numbers<[1], [0], [0], [1], [0, 0, 1, 1], [], []>} : vector<24x8xf32>, vector<8x132xf32>, vector<24x132xf32> -> vector<24x132xf32>
    %15 = arith.addf %10, %14 : vector<24x132xf32>
    %c0_12 = arith.constant 0 : index
    %c0_13 = arith.constant 0 : index
    %16 = vector.load %arg6[%c0_12, %c0_13] : memref<24x1xf32, #tpu.memory_space<vmem>>, vector<24x1xf32>
    %17 = vector.broadcast %16 : vector<24x1xf32> to vector<24x132xf32>
    %18 = arith.addf %15, %17 : vector<24x132xf32>
    %19 = vector.extract_strided_slice %18 {offsets = [0, 0], sizes = [8, 132], strides = [1, 1]} : vector<24x132xf32> to vector<8x132xf32>
    %20 = vector.extract_strided_slice %18 {offsets = [8, 0], sizes = [8, 132], strides = [1, 1]} : vector<24x132xf32> to vector<8x132xf32>
    %21 = vector.extract_strided_slice %18 {offsets = [16, 0], sizes = [8, 132], strides = [1, 1]} : vector<24x132xf32> to vector<8x132xf32>
    %22 = arith.negf %20 : vector<8x132xf32>
    %23 = math.exp %22 : vector<8x132xf32>
    %cst_14 = arith.constant 1.000000e+00 : f32
    %24 = vector.broadcast %cst_14 : f32 to vector<8x132xf32>
    %25 = arith.addf %24, %23 : vector<8x132xf32>
    %26 = arith.divf %24, %25 : vector<8x132xf32>
    %27 = arith.mulf %19, %26 : vector<8x132xf32>
    %28 = tpu.iota {dimensions = array<i32: 1>} : vector<1x132xi32>
    %c128_i32 = arith.constant 128 : i32
    %29 = arith.muli %arg1, %c128_i32 : i32
    %c4_i32 = arith.constant 4 : i32
    %30 = arith.subi %c4_i32, %29 : i32
    %31 = vector.broadcast %30 : i32 to vector<1x132xi32>
    %32 = arith.cmpi sge, %28, %31 : vector<1x132xi32>
    %cst_15 = arith.constant 0.000000e+00 : f32
    %33 = vector.shape_cast %32 : vector<1x132xi1> to vector<1x132xi1>
    %34 = vector.broadcast %33 : vector<1x132xi1> to vector<8x132xi1>
    %35 = vector.broadcast %cst_15 : f32 to vector<8x132xf32>
    %36 = arith.select %34, %27, %35 : vector<8x132xi1>, vector<8x132xf32>
    %cst_16 = arith.constant 0.000000e+00 : f32
    %37 = vector.shape_cast %32 : vector<1x132xi1> to vector<1x132xi1>
    %38 = vector.broadcast %37 : vector<1x132xi1> to vector<8x132xi1>
    %39 = vector.broadcast %cst_16 : f32 to vector<8x132xf32>
    %40 = arith.select %38, %20, %39 : vector<8x132xi1>, vector<8x132xf32>
    %c0_17 = arith.constant 0 : index
    %c0_18 = arith.constant 0 : index
    %c0_19 = arith.constant 0 : index
    %41 = vector.load %arg4[%c0_17, %c0_18, %c0_19] : memref<3x8x8xf32, #tpu.memory_space<vmem>>, vector<1x8x8xf32>
    %42 = vector.shape_cast %41 : vector<1x8x8xf32> to vector<8x8xf32>
    %43 = vector.extract_strided_slice %36 {offsets = [0, 0], sizes = [8, 128], strides = [1, 1]} : vector<8x132xf32> to vector<8x128xf32>
    %cst_20 = arith.constant dense<0.000000e+00> : vector<8x128xf32>
    %44 = tpu.matmul %42, %43, %cst_20 {dimension_numbers = #tpu.dot_dimension_numbers<[1], [0], [0], [1], [0, 0, 1, 1], [], []>} : vector<8x8xf32>, vector<8x128xf32>, vector<8x128xf32> -> vector<8x128xf32>
    %c0_21 = arith.constant 0 : index
    %c0_22 = arith.constant 0 : index
    %c0_23 = arith.constant 0 : index
    %45 = vector.load %arg5[%c0_21, %c0_22, %c0_23] : memref<3x8x8xf32, #tpu.memory_space<vmem>>, vector<1x8x8xf32>
    %46 = vector.shape_cast %45 : vector<1x8x8xf32> to vector<8x8xf32>
    %47 = vector.extract_strided_slice %40 {offsets = [0, 0], sizes = [8, 128], strides = [1, 1]} : vector<8x132xf32> to vector<8x128xf32>
    %cst_24 = arith.constant dense<0.000000e+00> : vector<8x128xf32>
    %48 = tpu.matmul %46, %47, %cst_24 {dimension_numbers = #tpu.dot_dimension_numbers<[1], [0], [0], [1], [0, 0, 1, 1], [], []>} : vector<8x8xf32>, vector<8x128xf32>, vector<8x128xf32> -> vector<8x128xf32>
    %c1_25 = arith.constant 1 : index
    %c0_26 = arith.constant 0 : index
    %c0_27 = arith.constant 0 : index
    %49 = vector.load %arg4[%c1_25, %c0_26, %c0_27] : memref<3x8x8xf32, #tpu.memory_space<vmem>>, vector<1x8x8xf32>
    %50 = vector.shape_cast %49 : vector<1x8x8xf32> to vector<8x8xf32>
    %51 = vector.extract_strided_slice %36 {offsets = [0, 2], sizes = [8, 128], strides = [1, 1]} : vector<8x132xf32> to vector<8x128xf32>
    %cst_28 = arith.constant dense<0.000000e+00> : vector<8x128xf32>
    %52 = tpu.matmul %50, %51, %cst_28 {dimension_numbers = #tpu.dot_dimension_numbers<[1], [0], [0], [1], [0, 0, 1, 1], [], []>} : vector<8x8xf32>, vector<8x128xf32>, vector<8x128xf32> -> vector<8x128xf32>
    %53 = arith.addf %44, %52 : vector<8x128xf32>
    %c1_29 = arith.constant 1 : index
    %c0_30 = arith.constant 0 : index
    %c0_31 = arith.constant 0 : index
    %54 = vector.load %arg5[%c1_29, %c0_30, %c0_31] : memref<3x8x8xf32, #tpu.memory_space<vmem>>, vector<1x8x8xf32>
    %55 = vector.shape_cast %54 : vector<1x8x8xf32> to vector<8x8xf32>
    %56 = vector.extract_strided_slice %40 {offsets = [0, 2], sizes = [8, 128], strides = [1, 1]} : vector<8x132xf32> to vector<8x128xf32>
    %cst_32 = arith.constant dense<0.000000e+00> : vector<8x128xf32>
    %57 = tpu.matmul %55, %56, %cst_32 {dimension_numbers = #tpu.dot_dimension_numbers<[1], [0], [0], [1], [0, 0, 1, 1], [], []>} : vector<8x8xf32>, vector<8x128xf32>, vector<8x128xf32> -> vector<8x128xf32>
    %58 = arith.addf %48, %57 : vector<8x128xf32>
    %c2_33 = arith.constant 2 : index
    %c0_34 = arith.constant 0 : index
    %c0_35 = arith.constant 0 : index
    %59 = vector.load %arg4[%c2_33, %c0_34, %c0_35] : memref<3x8x8xf32, #tpu.memory_space<vmem>>, vector<1x8x8xf32>
    %60 = vector.shape_cast %59 : vector<1x8x8xf32> to vector<8x8xf32>
    %61 = vector.extract_strided_slice %36 {offsets = [0, 4], sizes = [8, 128], strides = [1, 1]} : vector<8x132xf32> to vector<8x128xf32>
    %cst_36 = arith.constant dense<0.000000e+00> : vector<8x128xf32>
    %62 = tpu.matmul %60, %61, %cst_36 {dimension_numbers = #tpu.dot_dimension_numbers<[1], [0], [0], [1], [0, 0, 1, 1], [], []>} : vector<8x8xf32>, vector<8x128xf32>, vector<8x128xf32> -> vector<8x128xf32>
    %63 = arith.addf %53, %62 : vector<8x128xf32>
    %c2_37 = arith.constant 2 : index
    %c0_38 = arith.constant 0 : index
    %c0_39 = arith.constant 0 : index
    %64 = vector.load %arg5[%c2_37, %c0_38, %c0_39] : memref<3x8x8xf32, #tpu.memory_space<vmem>>, vector<1x8x8xf32>
    %65 = vector.shape_cast %64 : vector<1x8x8xf32> to vector<8x8xf32>
    %66 = vector.extract_strided_slice %40 {offsets = [0, 4], sizes = [8, 128], strides = [1, 1]} : vector<8x132xf32> to vector<8x128xf32>
    %cst_40 = arith.constant dense<0.000000e+00> : vector<8x128xf32>
    %67 = tpu.matmul %65, %66, %cst_40 {dimension_numbers = #tpu.dot_dimension_numbers<[1], [0], [0], [1], [0, 0, 1, 1], [], []>} : vector<8x8xf32>, vector<8x128xf32>, vector<8x128xf32> -> vector<8x128xf32>
    %68 = arith.addf %58, %67 : vector<8x128xf32>
    %c0_41 = arith.constant 0 : index
    %c0_42 = arith.constant 0 : index
    %69 = vector.load %arg7[%c0_41, %c0_42] : memref<8x1xf32, #tpu.memory_space<vmem>>, vector<8x1xf32>
    %70 = vector.broadcast %69 : vector<8x1xf32> to vector<8x128xf32>
    %71 = arith.addf %63, %70 : vector<8x128xf32>
    %c0_43 = arith.constant 0 : index
    %c0_44 = arith.constant 0 : index
    %72 = vector.load %arg8[%c0_43, %c0_44] : memref<8x1xf32, #tpu.memory_space<vmem>>, vector<8x1xf32>
    %73 = vector.broadcast %72 : vector<8x1xf32> to vector<8x128xf32>
    %74 = arith.addf %68, %73 : vector<8x128xf32>
    %75 = arith.negf %74 : vector<8x128xf32>
    %76 = math.exp %75 : vector<8x128xf32>
    %cst_45 = arith.constant 1.000000e+00 : f32
    %77 = vector.broadcast %cst_45 : f32 to vector<8x128xf32>
    %78 = arith.addf %77, %76 : vector<8x128xf32>
    %79 = arith.divf %77, %78 : vector<8x128xf32>
    %80 = arith.mulf %71, %79 : vector<8x128xf32>
    %81 = vector.extract_strided_slice %21 {offsets = [0, 4], sizes = [8, 128], strides = [1, 1]} : vector<8x132xf32> to vector<8x128xf32>
    %82 = arith.addf %80, %81 : vector<8x128xf32>
    %c0_46 = arith.constant 0 : index
    %c0_47 = arith.constant 0 : index
    %c0_48 = arith.constant 0 : index
    %83 = vector.load %arg9[%c0_46, %c0_47, %c0_48] : memref<1x8x128xf32, #tpu.memory_space<vmem>>, vector<1x8x128xf32>
    %84 = vector.shape_cast %83 : vector<1x8x128xf32> to vector<8x128xf32>
    %85 = vector.shape_cast %82 : vector<8x128xf32> to vector<1x8x128xf32>
    tpu.vector_store %arg9[%c0_46, %c0_47, %c0_48], %85 {strides = array<i32>} : memref<1x8x128xf32, #tpu.memory_space<vmem>>, vector<1x8x128xf32>,
    return
  }
  func.func @transform_0(%arg0: i32, %arg1: i32) -> (i32, i32, i32, i32) {
    %c0_i32 = arith.constant 0 : i32
    %c0_i32_0 = arith.constant 0 : i32
    %c0_i32_1 = arith.constant 0 : i32
    return %arg0, %arg1, %c0_i32, %c0_i32_0 : i32, i32, i32, i32
  }
  func.func @transform_1(%arg0: i32, %arg1: i32) -> (i32, i32, i32) {
    %c0_i32 = arith.constant 0 : i32
    %c0_i32_0 = arith.constant 0 : i32
    %c0_i32_1 = arith.constant 0 : i32
    %c0_i32_2 = arith.constant 0 : i32
    return %c0_i32, %c0_i32_0, %c0_i32_1 : i32, i32, i32
  }
  func.func @transform_2(%arg0: i32, %arg1: i32) -> (i32, i32, i32) {
    %c0_i32 = arith.constant 0 : i32
    %c0_i32_0 = arith.constant 0 : i32
    %c0_i32_1 = arith.constant 0 : i32
    %c0_i32_2 = arith.constant 0 : i32
    return %c0_i32, %c0_i32_0, %c0_i32_1 : i32, i32, i32
  }
  func.func @transform_3(%arg0: i32, %arg1: i32) -> (i32, i32, i32) {
    %c0_i32 = arith.constant 0 : i32
    %c0_i32_0 = arith.constant 0 : i32
    %c0_i32_1 = arith.constant 0 : i32
    %c0_i32_2 = arith.constant 0 : i32
    return %c0_i32, %c0_i32_0, %c0_i32_1 : i32, i32, i32
  }
  func.func @transform_4(%arg0: i32, %arg1: i32) -> (i32, i32) {
    %c0_i32 = arith.constant 0 : i32
    %c0_i32_0 = arith.constant 0 : i32
    %c0_i32_1 = arith.constant 0 : i32
    return %c0_i32, %c0_i32_0 : i32, i32
  }
  func.func @transform_5(%arg0: i32, %arg1: i32) -> (i32, i32) {
    %c0_i32 = arith.constant 0 : i32
    %c0_i32_0 = arith.constant 0 : i32
    %c0_i32_1 = arith.constant 0 : i32
    return %c0_i32, %c0_i32_0 : i32, i32
  }
  func.func @transform_6(%arg0: i32, %arg1: i32) -> (i32, i32) {
    %c0_i32 = arith.constant 0 : i32
    %c0_i32_0 = arith.constant 0 : i32
    %c0_i32_1 = arith.constant 0 : i32
    return %c0_i32, %c0_i32_0 : i32, i32
  }
  func.func @transform_7(%arg0: i32, %arg1: i32) -> (i32, i32, i32) {
    %c0_i32 = arith.constant 0 : i32
    %c0_i32_0 = arith.constant 0 : i32
    return %arg0, %c0_i32, %arg1 : i32, i32, i32
  }
}

</mosaic_0001>

<llo_original>
// kernel: gated_temporal_block_last_sep.1
$region0: #{gated_temporal_block_last_sep.1}
  #allocation0 [shape = 'u32[]', space=smem, size = 0x4, offset = 0x4, fixed_abs, tag = 'smem constant byte address 0x4 - core index']
  #allocation1 [shape = 'u32[144,128]{1,0:T(1,128)}', space=vmem, size = 0x12000, scoped, tag = 'internal scratch']
  %s0 = inlined_call_operand.vmem [shape: f32[2,1,8,136], index: 0, kind: input, shape index: {}]
  %s1 = inlined_call_operand.vmem [shape: f32[3,24,8], index: 1, kind: input, shape index: {}]
  %s2 = inlined_call_operand.vmem [shape: f32[3,8,8], index: 2, kind: input, shape index: {}]
  %s3 = inlined_call_operand.vmem [shape: f32[3,8,8], index: 3, kind: input, shape index: {}]
  %s4 = inlined_call_operand.vmem [shape: f32[24,1], index: 4, kind: input, shape index: {}]
  %s5 = inlined_call_operand.vmem [shape: f32[8,1], index: 5, kind: input, shape index: {}]
  %s6 = inlined_call_operand.vmem [shape: f32[8,1], index: 6, kind: input, shape index: {}]
  %s7 = inlined_call_operand.hbm [shape: f32[2,8,128], index: 7, kind: output, shape index: {}]
  %s8 = sld [smem:[#allocation0]]
  $region61: #{gated_temporal_block_last_sep.1} parent=0
    _
  %s10 = ssub.s32 1, %s8
  %s11 = scalar_select 0, %s10, %s8
  $region1: #{gated_temporal_block_last_sep.1} parent=0
    #allocation2 [shape = 'u8[8192]{0}', space=vmem, size = 0x2000, scoped, tag = 'output window, operand 0']
    #allocation3 [shape = 's32[2]{0}', space=sflag, size = 0x8, scoped, tag = 'scoped memory for gated_temporal_block_last_sep.1']
    %12 = vsyncpa [#allocation3], 0
    %s13 = scalar_lea.sflag [#allocation3], 1
    %14 = vsyncpa %s13, 0
    loop: start=0, step=1, limit=4
    $region2: #{gated_temporal_block_last_sep.1} parent=1 // loop_pre_header
      _
    $region3: #{gated_temporal_block_last_sep.1} parent=1 // loop_header
      %s16 = sphi 0, %s20
      %p17 = scmp.ge.s32.totalorder %s16, 4
      %s23 = sphi 0, %s35
      %s24 = sphi 0, %s31
      %s25 = sphi 0, %s23
      %s26 = sphi 0, %s24
      %s27 = sphi 0, %s25
      %s28 = sphi 0, %s26
      %s40 = sphi 0, %s42
      %s43 = sphi 0, %s40
      %s44 = sphi 0, %s43
      %s60 = sphi 0, %s44
      %s64 = sphi 0, %s64
      %s66 = sphi 0, %s64
      %s67 = sphi 0, %s66
      %s81 = sphi 0, %s67
      %s85 = sphi 0, %s85
      %s87 = sphi 0, %s85
      %s88 = sphi 0, %s87
      %s102 = sphi 0, %s88
      %s106 = sphi 0, %s106
      %s108 = sphi 0, %s106
      %s109 = sphi 0, %s108
      %s123 = sphi 0, %s109
      %s127 = sphi 0, %s127
      %s129 = sphi 0, %s127
      %s130 = sphi 0, %s129
      %s144 = sphi 0, %s130
      %s148 = sphi 0, %s148
      %s150 = sphi 0, %s148
      %s151 = sphi 0, %s150
      %s165 = sphi 0, %s151
      %s169 = sphi 0, %s169
      %s171 = sphi 0, %s169
      %s172 = sphi 0, %s171
      %s186 = sphi 0, %s172
      %s194 = sphi 0, %s196
      %s197 = sphi 0, %s194
      %s198 = sphi 0, %s197
      %s214 = sphi 0, %s198
    $region4: #{gated_temporal_block_last_sep.1} parent=1 // loop_header_branch
      %19 = sbr.rel (%p17) target = $region8
    $region5: #{gated_temporal_block_last_sep.1} parent=1 // loop_body
      %s21 = ssub.s32 %s16, 1
      %s22 = ssub.s32 %s16, 2
      %s29 = sadd.s32 1, %s24
      %p30 = scmp.ge.s32.totalorder %s29, 1
      %s31 = scalar_select %p30, 0, %s29
      %s32 = sadd.s32 1, %s23
      %s33 = scalar_select %p30, %s32, %s23
      %p34 = scmp.ge.s32.totalorder %s33, 2
      %s35 = scalar_select %p34, 0, %s33
      %s36 = ssub.s32 %s23, %s35
      %s37 = ssub.s32 %s24, %s31
      %s38 = sor.u32 %s36, %s37
      %p39 = scmp.eq.s32.totalorder %s38, 0
      %s41 = sadd.s32 %s40, 1
      %s42 = scalar_select %p39, %s40, %s41
      %p45 = pneg %p39
      %p46 = scmp.eq.s32.totalorder %s16, 1
      %p47 = por %p45, %p46
      %p48 = scmp.ne.s32.totalorder %s40, %s43
      %p49 = scmp.eq.s32.totalorder %s16, 0
      %p50 = por %p48, %p49
      %p51 = scmp.ne.s32.totalorder %s40, %s43
      %p52 = scmp.eq.s32.totalorder %s21, 1
      %p53 = por %p51, %p52
      %p54 = scmp.ne.s32.totalorder %s43, %s44
      %p55 = scmp.eq.s32.totalorder %s21, 0
      %p56 = por %p54, %p55
      %p57 = scmp.ne.s32.totalorder %s43, %s44
      %p58 = scmp.eq.s32.totalorder %s22, 1
      %p59 = por %p57, %p58
      %p61 = scmp.ne.s32.totalorder %s44, %s60
      %p62 = scmp.eq.s32.totalorder %s22, 0
      %p63 = por %p61, %p62
      %s65 = sadd.s32 %s64, 1
      %p68 = scmp.eq.s32.totalorder %s16, 1
      %p69 = scmp.ne.s32.totalorder %s64, %s66
      %p70 = scmp.eq.s32.totalorder %s16, 0
      %p71 = por %p69, %p70
      %p72 = scmp.ne.s32.totalorder %s64, %s66
      %p73 = scmp.eq.s32.totalorder %s21, 1
      %p74 = por %p72, %p73
      %p75 = scmp.ne.s32.totalorder %s66, %s67
      %p76 = scmp.eq.s32.totalorder %s21, 0
      %p77 = por %p75, %p76
      %p78 = scmp.ne.s32.totalorder %s66, %s67
      %p79 = scmp.eq.s32.totalorder %s22, 1
      %p80 = por %p78, %p79
      %p82 = scmp.ne.s32.totalorder %s67, %s81
      %p83 = scmp.eq.s32.totalorder %s22, 0
      %p84 = por %p82, %p83
      %s86 = sadd.s32 %s85, 1
      %p89 = scmp.eq.s32.totalorder %s16, 1
      %p90 = scmp.ne.s32.totalorder %s85, %s87
      %p91 = scmp.eq.s32.totalorder %s16, 0
      %p92 = por %p90, %p91
      %p93 = scmp.ne.s32.totalorder %s85, %s87
      %p94 = scmp.eq.s32.totalorder %s21, 1
      %p95 = por %p93, %p94
      %p96 = scmp.ne.s32.totalorder %s87, %s88
      %p97 = scmp.eq.s32.totalorder %s21, 0
      %p98 = por %p96, %p97
      %p99 = scmp.ne.s32.totalorder %s87, %s88
      %p100 = scmp.eq.s32.totalorder %s22, 1
      %p101 = por %p99, %p100
      %p103 = scmp.ne.s32.totalorder %s88, %s102
      %p104 = scmp.eq.s32.totalorder %s22, 0
      %p105 = por %p103, %p104
      %s107 = sadd.s32 %s106, 1
      %p110 = scmp.eq.s32.totalorder %s16, 1
      %p111 = scmp.ne.s32.totalorder %s106, %s108
      %p112 = scmp.eq.s32.totalorder %s16, 0
      %p113 = por %p111, %p112
      %p114 = scmp.ne.s32.totalorder %s106, %s108
      %p115 = scmp.eq.s32.totalorder %s21, 1
      %p116 = por %p114, %p115
      %p117 = scmp.ne.s32.totalorder %s108, %s109
      %p118 = scmp.eq.s32.totalorder %s21, 0
      %p119 = por %p117, %p118
      %p120 = scmp.ne.s32.totalorder %s108, %s109
      %p121 = scmp.eq.s32.totalorder %s22, 1
      %p122 = por %p120, %p121
      %p124 = scmp.ne.s32.totalorder %s109, %s123
      %p125 = scmp.eq.s32.totalorder %s22, 0
      %p126 = por %p124, %p125
      %s128 = sadd.s32 %s127, 1
      %p131 = scmp.eq.s32.totalorder %s16, 1
      %p132 = scmp.ne.s32.totalorder %s127, %s129
      %p133 = scmp.eq.s32.totalorder %s16, 0
      %p134 = por %p132, %p133
      %p135 = scmp.ne.s32.totalorder %s127, %s129
      %p136 = scmp.eq.s32.totalorder %s21, 1
      %p137 = por %p135, %p136
      %p138 = scmp.ne.s32.totalorder %s129, %s130
      %p139 = scmp.eq.s32.totalorder %s21, 0
      %p140 = por %p138, %p139
      %p141 = scmp.ne.s32.totalorder %s129, %s130
      %p142 = scmp.eq.s32.totalorder %s22, 1
      %p143 = por %p141, %p142
      %p145 = scmp.ne.s32.totalorder %s130, %s144
      %p146 = scmp.eq.s32.totalorder %s22, 0
      %p147 = por %p145, %p146
      %s149 = sadd.s32 %s148, 1
      %p152 = scmp.eq.s32.totalorder %s16, 1
      %p153 = scmp.ne.s32.totalorder %s148, %s150
      %p154 = scmp.eq.s32.totalorder %s16, 0
      %p155 = por %p153, %p154
      %p156 = scmp.ne.s32.totalorder %s148, %s150
      %p157 = scmp.eq.s32.totalorder %s21, 1
      %p158 = por %p156, %p157
      %p159 = scmp.ne.s32.totalorder %s150, %s151
      %p160 = scmp.eq.s32.totalorder %s21, 0
      %p161 = por %p159, %p160
      %p162 = scmp.ne.s32.totalorder %s150, %s151
      %p163 = scmp.eq.s32.totalorder %s22, 1
      %p164 = por %p162, %p163
      %p166 = scmp.ne.s32.totalorder %s151, %s165
      %p167 = scmp.eq.s32.totalorder %s22, 0
      %p168 = por %p166, %p167
      %s170 = sadd.s32 %s169, 1
      %p173 = scmp.eq.s32.totalorder %s16, 1
      %p174 = scmp.ne.s32.totalorder %s169, %s171
      %p175 = scmp.eq.s32.totalorder %s16, 0
      %p176 = por %p174, %p175
      %p177 = scmp.ne.s32.totalorder %s169, %s171
      %p178 = scmp.eq.s32.totalorder %s21, 1
      %p179 = por %p177, %p178
      %p180 = scmp.ne.s32.totalorder %s171, %s172
      %p181 = scmp.eq.s32.totalorder %s21, 0
      %p182 = por %p180, %p181
      %p183 = scmp.ne.s32.totalorder %s171, %s172
      %p184 = scmp.eq.s32.totalorder %s22, 1
      %p185 = por %p183, %p184
      %p187 = scmp.ne.s32.totalorder %s172, %s186
      %p188 = scmp.eq.s32.totalorder %s22, 0
      %p189 = por %p187, %p188
      %s190 = ssub.s32 %s23, %s35
      %s191 = ssub.s32 %s24, %s31
      %s192 = sor.u32 %s190, %s191
      %p193 = scmp.eq.s32.totalorder %s192, 0
      %s195 = sadd.s32 %s194, 1
      %s196 = scalar_select %p193, %s194, %s195
      %p199 = pneg %p193
      %p200 = scmp.eq.s32.totalorder %s16, 1
      %p201 = por %p199, %p200
      %p202 = scmp.ne.s32.totalorder %s194, %s197
      %p203 = scmp.eq.s32.totalorder %s16, 0
      %p204 = por %p202, %p203
      %p205 = scmp.ne.s32.totalorder %s194, %s197
      %p206 = scmp.eq.s32.totalorder %s21, 1
      %p207 = por %p205, %p206
      %p208 = scmp.ne.s32.totalorder %s197, %s198
      %p209 = scmp.eq.s32.totalorder %s21, 0
      %p210 = por %p208, %p209
      %p211 = scmp.ne.s32.totalorder %s197, %s198
      %p212 = scmp.eq.s32.totalorder %s22, 1
      %p213 = por %p211, %p212
      %p215 = scmp.ne.s32.totalorder %s198, %s214
      %p216 = scmp.eq.s32.totalorder %s22, 0
      %p217 = por %p215, %p216
      %p218 = scmp.le.s32.totalorder 1, %s16
      %p219 = scmp.lt.s32.totalorder %s16, 3
      %p220 = pnand %p218, %p219
      %p221 = pneg %p220
      // Predicated region
      $region9: #{gated_temporal_block_last_sep.1} parent=5 // pred_check
        _
      $region10: #{gated_temporal_block_last_sep.1} parent=5 // pred_check_branch
        %223 = sbr.rel (%p220) target = $region12
      $region11: #{gated_temporal_block_last_sep.1} parent=5 // pred_region
        %s224 = ssub.s32 %s16, 1
        // Predicated region
        $region13: #{gated_temporal_block_last_sep.1} parent=11 // pred_check
          %p225 = pneg %p77
        $region14: #{gated_temporal_block_last_sep.1} parent=11 // pred_check_branch
          %227 = sbr.rel (%p225) target = $region16
        $region15: #{gated_temporal_block_last_sep.1} parent=11 // pred_region
          _
        $region16: #{gated_temporal_block_last_sep.1} parent=11 // pred_fallthru
          _
        // Predicated region
        $region17: #{gated_temporal_block_last_sep.1} parent=11 // pred_check
          %p228 = pneg %p98
        $region18: #{gated_temporal_block_last_sep.1} parent=11 // pred_check_branch
          %230 = sbr.rel (%p228) target = $region20
        $region19: #{gated_temporal_block_last_sep.1} parent=11 // pred_region
          _
        $region20: #{gated_temporal_block_last_sep.1} parent=11 // pred_fallthru
          _
        // Predicated region
        $region21: #{gated_temporal_block_last_sep.1} parent=11 // pred_check
          %p231 = pneg %p119
        $region22: #{gated_temporal_block_last_sep.1} parent=11 // pred_check_branch
          %233 = sbr.rel (%p231) target = $region24
        $region23: #{gated_temporal_block_last_sep.1} parent=11 // pred_region
          _
        $region24: #{gated_temporal_block_last_sep.1} parent=11 // pred_fallthru
          _
        // Predicated region
        $region25: #{gated_temporal_block_last_sep.1} parent=11 // pred_check
          %p234 = pneg %p140
        $region26: #{gated_temporal_block_last_sep.1} parent=11 // pred_check_branch
          %236 = sbr.rel (%p234) target = $region28
        $region27: #{gated_temporal_block_last_sep.1} parent=11 // pred_region
          _
        $region28: #{gated_temporal_block_last_sep.1} parent=11 // pred_fallthru
          _
        // Predicated region
        $region29: #{gated_temporal_block_last_sep.1} parent=11 // pred_check
          %p237 = pneg %p161
        $region30: #{gated_temporal_block_last_sep.1} parent=11 // pred_check_branch
          %239 = sbr.rel (%p237) target = $region32
        $region31: #{gated_temporal_block_last_sep.1} parent=11 // pred_region
          _
        $region32: #{gated_temporal_block_last_sep.1} parent=11 // pred_fallthru
          _
        // Predicated region
        $region33: #{gated_temporal_block_last_sep.1} parent=11 // pred_check
          %p240 = pneg %p182
        $region34: #{gated_temporal_block_last_sep.1} parent=11 // pred_check_branch
          %242 = sbr.rel (%p240) target = $region36
        $region35: #{gated_temporal_block_last_sep.1} parent=11 // pred_region
          _
        $region36: #{gated_temporal_block_last_sep.1} parent=11 // pred_fallthru
          _
      $region12: #{gated_temporal_block_last_sep.1} parent=5 // pred_fallthru
        _
      %p243 = scmp.lt.s32.totalorder %s16, 2
      // Predicated region
      $region37: #{gated_temporal_block_last_sep.1} parent=5 // pred_check
        %p244 = pneg %p243
      $region38: #{gated_temporal_block_last_sep.1} parent=5 // pred_check_branch
        %246 = sbr.rel (%p244) target = $region40
      $region39: #{gated_temporal_block_last_sep.1} parent=5 // pred_region
        // Predicated region
        $region41: #{gated_temporal_block_last_sep.1} parent=39 // pred_check
          %p247 = pneg %p50
        $region42: #{gated_temporal_block_last_sep.1} parent=39 // pred_check_branch
          %249 = sbr.rel (%p247) target = $region44
        $region43: #{gated_temporal_block_last_sep.1} parent=39 // pred_region
          %p250 = scmp.lt.s32.totalorder %s23, 1
          %s251 = scalar_select %p250, %s23, 1
          %p252 = scmp.lt.s32.totalorder %s24, 0
          %s253 = scalar_select %p252, %s24, 0
          %s254 = smul.addr %s253, 2
          %s255 = smul.addr %s251, 2
          %s256 = sadd.s32 %s254, %s255
          %s257 = smul.addr %s256, 8
          %s258 = scalar_lea.vmem %s0, %s257
        $region44: #{gated_temporal_block_last_sep.1} parent=39 // pred_fallthru
          _
      $region40: #{gated_temporal_block_last_sep.1} parent=5 // pred_fallthru
        _
      %p259 = scmp.le.s32.totalorder 1, %s16
      %p260 = scmp.lt.s32.totalorder %s16, 3
      %p261 = pnand %p259, %p260
      %p262 = pneg %p261
      // Predicated region
      $region45: #{gated_temporal_block_last_sep.1} parent=5 // pred_check
        _
      $region46: #{gated_temporal_block_last_sep.1} parent=5 // pred_check_branch
        %264 = sbr.rel (%p261) target = $region48
      $region47: #{gated_temporal_block_last_sep.1} parent=5 // pred_region
        %s265 = ssub.s32 %s16, 1
        %p266 = scmp.lt.s32.totalorder %s25, 1
        %s267 = scalar_select %p266, %s25, 1
        %p268 = scmp.lt.s32.totalorder %s26, 0
        %s269 = scalar_select %p268, %s26, 0
        %s270 = smul.addr %s269, 2
        %s271 = smul.addr %s267, 2
        %s272 = sadd.s32 %s270, %s271
        %s273 = smul.addr %s272, 8
        %s274 = scalar_lea.vmem %s0, %s273
        %p275 = pneg %p56
        %p276 = pneg %p53
        %p277 = pneg %p77
        %p278 = pneg %p74
        %p279 = pneg %p98
        %p280 = pneg %p95
        %p281 = pneg %p119
        %p282 = pneg %p116
        %p283 = pneg %p140
        %p284 = pneg %p137
        %p285 = pneg %p161
        %p286 = pneg %p158
        %p287 = pneg %p182
        %p288 = pneg %p179
        %p289 = pneg %p210
        %p290 = pneg %p207
        %s291 = sand.u32 %s197, 1
        %s292 = scalar_lea.sflag [#allocation3], %s291
        %s293 = sand.u32 %s197, 1
        %s294 = smul.addr %s293, 8
        %s295 = scalar_lea.vmem [#allocation2], %s294
        %p296 = scmp.lt.s32.totalorder %s25, 1
        %s297 = scalar_select %p296, %s25, 1
        %p298 = scmp.lt.s32.totalorder %s26, 0
        %s299 = scalar_select %p298, %s26, 0
        %s300 = smul.addr %s299, 2
        %s301 = smul.addr %s297, 2
        %s302 = sadd.s32 %s300, %s301
        %s303 = smul.addr %s302, 8
        %s304 = scalar_lea.vmem %s0, %s303
        %v305 = vld [vmem:[%s304] sm:$0xff]
        %v306 = vld [vmem:[%s304 + $0x8] sm:$0xff]
        %v307 = vld [vmem:[%s1] sm:$0xff]
        %v308 = vld [vmem:[%s1 + $0x8] sm:$0xff]
        %v309 = vld [vmem:[%s1 + $0x10] sm:$0xff]
        %s310 = scalar_lea.vmem %s1, 24
        %v311 = vld [vmem:[%s310] sm:$0xff]
        %v312 = vld [vmem:[%s310 + $0x8] sm:$0xff]
        %v313 = vld [vmem:[%s310 + $0x10] sm:$0xff]
        %316 = vrot.lane.b32.xlu0 %v305, 126
        %v317 = vpop.permute.xlu0 %316
        %318 = vrot.lane.b32.xlu0 %v306, 126
        %v319 = vpop.permute.xlu0 %318
        %vm320 = vcmask 1031168
        %v321 = vsel %vm320, %v317, %v319
        %vm324 = vcmask 64512
        %v326 = vsel %vm324, %v311, 0
        %v329 = vsel %vm324, %v312, 0
        %v332 = vsel %vm324, %v313, 0
        %334 = vmatprep.subr.mxu0 %v319
        %335 = vmatpush1.msra.mxu0 %v321
        %336 = vmatprep.subr.mxu0 0.0
        %337 = vmatpush1.msra.mxu0 0.0
        %338 = vmatprep.subr.mxu0 0.0
        %339 = vmatpush1.msra.mxu0 0.0
        %340 = vmatprep.subr.mxu0 0.0
        %341 = vmatpush1.msra.mxu0 0.0
        %342 = vmatprep.subr.mxu0 0.0
        %343 = vmatpush1.msra.mxu0 0.0
        %344 = vmatprep.subr.mxu0 0.0
        %345 = vmatpush1.msra.mxu0 0.0
        %346 = vmatprep.subr.mxu0 0.0
        %347 = vmatpush1.msra.mxu0 0.0
        %348 = vmatprep.subr.mxu0 0.0
        %349 = vmatpush1.msra.mxu0 0.0
        %350 = vmatprep.subr.mxu0 0.0
        %351 = vmatpush1.msra.mxu0 0.0
        %352 = vmatprep.subr.mxu0 0.0
        %353 = vmatpush1.msra.mxu0 0.0
        %354 = vmatprep.subr.mxu0 0.0
        %355 = vmatpush1.msra.mxu0 0.0
        %356 = vmatprep.subr.mxu0 0.0
        %357 = vmatpush1.msra.mxu0 0.0
        %358 = vmatprep.subr.mxu0 0.0
        %359 = vmatpush1.msra.mxu0 0.0
        %360 = vmatprep.subr.mxu0 0.0
        %361 = vmatpush1.msra.mxu0 0.0
        %362 = vmatprep.subr.mxu0 0.0
        %363 = vmatpush1.msra.mxu0 0.0
        %364 = vmatprep.subr.mxu0 0.0
        %365 = vmatpush1.msra.mxu0 0.0
        %366 = vmatprep.subr.mxu0 0.0
        %367 = vmatpush1.msra.mxu0 0.0
        %368 = vmatprep.subr.mxu0 0.0
        %369 = vmatpush1.msra.mxu0 0.0
        %370 = vmatprep.subr.mxu0 0.0
        %371 = vmatpush1.msra.mxu0 0.0
        %372 = vmatprep.subr.mxu0 0.0
        %373 = vmatpush1.msra.mxu0 0.0
        %374 = vmatprep.subr.mxu0 0.0
        %375 = vmatpush1.msra.mxu0 0.0
        %376 = vmatprep.subr.mxu0 0.0
        %377 = vmatpush1.msra.mxu0 0.0
        %378 = vmatprep.subr.mxu0 0.0
        %379 = vmatpush1.msra.mxu0 0.0
        %380 = vmatprep.subr.mxu0 0.0
        %381 = vmatpush1.msra.mxu0 0.0
        %382 = vmatprep.subr.mxu0 0.0
        %383 = vmatpush1.msra.mxu0 0.0
        %384 = vmatprep.subr.mxu0 0.0
        %385 = vmatpush1.msra.mxu0 0.0
        %386 = vmatprep.subr.mxu0 0.0
        %387 = vmatpush1.msra.mxu0 0.0
        %388 = vmatprep.subr.mxu0 0.0
        %389 = vmatpush1.msra.mxu0 0.0
        %390 = vmatprep.subr.mxu0 0.0
        %391 = vmatpush1.msra.mxu0 0.0
        %392 = vmatprep.subr.mxu0 0.0
        %393 = vmatpush1.msra.mxu0 0.0
        %394 = vmatprep.subr.mxu0 0.0
        %395 = vmatpush1.msra.mxu0 0.0
        %396 = vmatprep.subr.mxu0 0.0
        %397 = vmatpush1.msra.mxu0 0.0
        %398 = vmatprep.mubr.f32.mxu0 0.0
        %399 = vmatmul.mubr.f32.gmra.mrb[0].mxu0 %v326
        %v400 = vpop.f32.mrb[0].mxu0
        %v401 = vadd.f32 0.0, %v400
        %v402 = vpop.f32.mrb[0].mxu0
        %v403 = vadd.f32 0.0, %v402
        %404 = vmatprep.mubr.f32.mxu0 0.0
        %405 = vmatmul.mubr.f32.gmra.mrb[0].mxu0 %v329
        %v406 = vpop.f32.mrb[0].mxu0
        %v407 = vadd.f32 0.0, %v406
        %v408 = vpop.f32.mrb[0].mxu0
        %v409 = vadd.f32 0.0, %v408
        %410 = vmatprep.mubr.f32.mxu0 0.0
        %411 = vmatmul.mubr.f32.gmra.mrb[0].mxu0 %v332
        %v412 = vpop.f32.mrb[0].mxu0
        %v413 = vadd.f32 0.0, %v412
        %v414 = vpop.f32.mrb[0].mxu0
        %v415 = vadd.f32 0.0, %v414
        %416 = vdwg.mxu0
        %v418 = vsel %vm324, %v307, 0
        %v421 = vsel %vm324, %v308, 0
        %v424 = vsel %vm324, %v309, 0
        %426 = vmatprep.subr.mxu0 %v306
        %427 = vmatpush1.msra.mxu0 %v305
        %428 = vmatprep.subr.mxu0 0.0
        %429 = vmatpush1.msra.mxu0 0.0
        %430 = vmatprep.subr.mxu0 0.0
        %431 = vmatpush1.msra.mxu0 0.0
        %432 = vmatprep.subr.mxu0 0.0
        %433 = vmatpush1.msra.mxu0 0.0
        %434 = vmatprep.subr.mxu0 0.0
        %435 = vmatpush1.msra.mxu0 0.0
        %436 = vmatprep.subr.mxu0 0.0
        %437 = vmatpush1.msra.mxu0 0.0
        %438 = vmatprep.subr.mxu0 0.0
        %439 = vmatpush1.msra.mxu0 0.0
        %440 = vmatprep.subr.mxu0 0.0
        %441 = vmatpush1.msra.mxu0 0.0
        %442 = vmatprep.subr.mxu0 0.0
        %443 = vmatpush1.msra.mxu0 0.0
        %444 = vmatprep.subr.mxu0 0.0
        %445 = vmatpush1.msra.mxu0 0.0
        %446 = vmatprep.subr.mxu0 0.0
        %447 = vmatpush1.msra.mxu0 0.0
        %448 = vmatprep.subr.mxu0 0.0
        %449 = vmatpush1.msra.mxu0 0.0
        %450 = vmatprep.subr.mxu0 0.0
        %451 = vmatpush1.msra.mxu0 0.0
        %452 = vmatprep.subr.mxu0 0.0
        %453 = vmatpush1.msra.mxu0 0.0
        %454 = vmatprep.subr.mxu0 0.0
        %455 = vmatpush1.msra.mxu0 0.0
        %456 = vmatprep.subr.mxu0 0.0
        %457 = vmatpush1.msra.mxu0 0.0
        %458 = vmatprep.subr.mxu0 0.0
        %459 = vmatpush1.msra.mxu0 0.0
        %460 = vmatprep.subr.mxu0 0.0
        %461 = vmatpush1.msra.mxu0 0.0
        %462 = vmatprep.subr.mxu0 0.0
        %463 = vmatpush1.msra.mxu0 0.0
        %464 = vmatprep.subr.mxu0 0.0
        %465 = vmatpush1.msra.mxu0 0.0
        %466 = vmatprep.subr.mxu0 0.0
        %467 = vmatpush1.msra.mxu0 0.0
        %468 = vmatprep.subr.mxu0 0.0
        %469 = vmatpush1.msra.mxu0 0.0
        %470 = vmatprep.subr.mxu0 0.0
        %471 = vmatpush1.msra.mxu0 0.0
        %472 = vmatprep.subr.mxu0 0.0
        %473 = vmatpush1.msra.mxu0 0.0
        %474 = vmatprep.subr.mxu0 0.0
        %475 = vmatpush1.msra.mxu0 0.0
        %476 = vmatprep.subr.mxu0 0.0
        %477 = vmatpush1.msra.mxu0 0.0
        %478 = vmatprep.subr.mxu0 0.0
        %479 = vmatpush1.msra.mxu0 0.0
        %480 = vmatprep.subr.mxu0 0.0
        %481 = vmatpush1.msra.mxu0 0.0
        %482 = vmatprep.subr.mxu0 0.0
        %483 = vmatpush1.msra.mxu0 0.0
        %484 = vmatprep.subr.mxu0 0.0
        %485 = vmatpush1.msra.mxu0 0.0
        %486 = vmatprep.subr.mxu0 0.0
        %487 = vmatpush1.msra.mxu0 0.0
        %488 = vmatprep.subr.mxu0 0.0
        %489 = vmatpush1.msra.mxu0 0.0
        %490 = vmatprep.mubr.f32.mxu0 0.0
        %491 = vmatmul.mubr.f32.gmra.mrb[0].mxu0 %v418
        %v492 = vpop.f32.mrb[0].mxu0
        %v493 = vadd.f32 %v401, %v492
        %v494 = vpop.f32.mrb[0].mxu0
        %v495 = vadd.f32 %v403, %v494
        %496 = vmatprep.mubr.f32.mxu0 0.0
        %497 = vmatmul.mubr.f32.gmra.mrb[0].mxu0 %v421
        %v498 = vpop.f32.mrb[0].mxu0
        %v499 = vadd.f32 %v407, %v498
        %v500 = vpop.f32.mrb[0].mxu0
        %v501 = vadd.f32 %v409, %v500
        %502 = vmatprep.mubr.f32.mxu0 0.0
        %503 = vmatmul.mubr.f32.gmra.mrb[0].mxu0 %v424
        %v504 = vpop.f32.mrb[0].mxu0
        %v505 = vadd.f32 %v413, %v504
        %v506 = vpop.f32.mrb[0].mxu0
        %v507 = vadd.f32 %v415, %v506
        %508 = vdwg.mxu0
        %s509 = scalar_lea.vmem %s1, 48
        %v510 = vld [vmem:[%s509] sm:$0xff]
        %v511 = vld [vmem:[%s509 + $0x8] sm:$0xff]
        %v512 = vld [vmem:[%s509 + $0x10] sm:$0xff]
        %513 = vrot.lane.b32.xlu0 %v305, 124
        %v514 = vpop.permute.xlu0 %513
        %515 = vrot.lane.b32.xlu0 %v306, 124
        %v516 = vpop.permute.xlu0 %515
        %vm517 = vcmask 1014784
        %v518 = vsel %vm517, %v514, %v516
        %v522 = vsel %vm324, %v510, 0
        %v525 = vsel %vm324, %v511, 0
        %v528 = vsel %vm324, %v512, 0
        %530 = vmatprep.subr.mxu0 %v516
        %531 = vmatpush1.msra.mxu0 %v518
        %532 = vmatprep.subr.mxu0 0.0
        %533 = vmatpush1.msra.mxu0 0.0
        %534 = vmatprep.subr.mxu0 0.0
        %535 = vmatpush1.msra.mxu0 0.0
        %536 = vmatprep.subr.mxu0 0.0
        %537 = vmatpush1.msra.mxu0 0.0
        %538 = vmatprep.subr.mxu0 0.0
        %539 = vmatpush1.msra.mxu0 0.0
        %540 = vmatprep.subr.mxu0 0.0
        %541 = vmatpush1.msra.mxu0 0.0
        %542 = vmatprep.subr.mxu0 0.0
        %543 = vmatpush1.msra.mxu0 0.0
        %544 = vmatprep.subr.mxu0 0.0
        %545 = vmatpush1.msra.mxu0 0.0
        %546 = vmatprep.subr.mxu0 0.0
        %547 = vmatpush1.msra.mxu0 0.0
        %548 = vmatprep.subr.mxu0 0.0
        %549 = vmatpush1.msra.mxu0 0.0
        %550 = vmatprep.subr.mxu0 0.0
        %551 = vmatpush1.msra.mxu0 0.0
        %552 = vmatprep.subr.mxu0 0.0
        %553 = vmatpush1.msra.mxu0 0.0
        %554 = vmatprep.subr.mxu0 0.0
        %555 = vmatpush1.msra.mxu0 0.0
        %556 = vmatprep.subr.mxu0 0.0
        %557 = vmatpush1.msra.mxu0 0.0
        %558 = vmatprep.subr.mxu0 0.0
        %559 = vmatpush1.msra.mxu0 0.0
        %560 = vmatprep.subr.mxu0 0.0
        %561 = vmatpush1.msra.mxu0 0.0
        %562 = vmatprep.subr.mxu0 0.0
        %563 = vmatpush1.msra.mxu0 0.0
        %564 = vmatprep.subr.mxu0 0.0
        %565 = vmatpush1.msra.mxu0 0.0
        %566 = vmatprep.subr.mxu0 0.0
        %567 = vmatpush1.msra.mxu0 0.0
        %568 = vmatprep.subr.mxu0 0.0
        %569 = vmatpush1.msra.mxu0 0.0
        %570 = vmatprep.subr.mxu0 0.0
        %571 = vmatpush1.msra.mxu0 0.0
        %572 = vmatprep.subr.mxu0 0.0
        %573 = vmatpush1.msra.mxu0 0.0
        %574 = vmatprep.subr.mxu0 0.0
        %575 = vmatpush1.msra.mxu0 0.0
        %576 = vmatprep.subr.mxu0 0.0
        %577 = vmatpush1.msra.mxu0 0.0
        %578 = vmatprep.subr.mxu0 0.0
        %579 = vmatpush1.msra.mxu0 0.0
        %580 = vmatprep.subr.mxu0 0.0
        %581 = vmatpush1.msra.mxu0 0.0
        %582 = vmatprep.subr.mxu0 0.0
        %583 = vmatpush1.msra.mxu0 0.0
        %584 = vmatprep.subr.mxu0 0.0
        %585 = vmatpush1.msra.mxu0 0.0
        %586 = vmatprep.subr.mxu0 0.0
        %587 = vmatpush1.msra.mxu0 0.0
        %588 = vmatprep.subr.mxu0 0.0
        %589 = vmatpush1.msra.mxu0 0.0
        %590 = vmatprep.subr.mxu0 0.0
        %591 = vmatpush1.msra.mxu0 0.0
        %592 = vmatprep.subr.mxu0 0.0
        %593 = vmatpush1.msra.mxu0 0.0
        %594 = vmatprep.mubr.f32.mxu0 0.0
        %595 = vmatmul.mubr.f32.gmra.mrb[0].mxu0 %v522
        %v596 = vpop.f32.mrb[0].mxu0
        %v597 = vadd.f32 0.0, %v596
        %v598 = vpop.f32.mrb[0].mxu0
        %v599 = vadd.f32 0.0, %v598
        %600 = vmatprep.mubr.f32.mxu0 0.0
        %601 = vmatmul.mubr.f32.gmra.mrb[0].mxu0 %v525
        %v602 = vpop.f32.mrb[0].mxu0
        %v603 = vadd.f32 0.0, %v602
        %v604 = vpop.f32.mrb[0].mxu0
        %v605 = vadd.f32 0.0, %v604
        %606 = vmatprep.mubr.f32.mxu0 0.0
        %607 = vmatmul.mubr.f32.gmra.mrb[0].mxu0 %v528
        %v608 = vpop.f32.mrb[0].mxu0
        %v609 = vadd.f32 0.0, %v608
        %v610 = vpop.f32.mrb[0].mxu0
        %v611 = vadd.f32 0.0, %v610
        %612 = vdwg.mxu0
        %v613 = vadd.f32 %v493, %v597
        %v614 = vadd.f32 %v495, %v599
        %v615 = vadd.f32 %v499, %v603
        %v616 = vadd.f32 %v501, %v605
        %v617 = vadd.f32 %v505, %v609
        %v618 = vadd.f32 %v507, %v611
        %v619 = vld [vmem:[%s4] sm:$0xff]
        %v620 = vld [vmem:[%s4 + $0x8] sm:$0xff]
        %v621 = vld [vmem:[%s4 + $0x10] sm:$0xff]
        %623 = vset.pattern.permute.xlu0 0
        %624 = vperm.xlu0 %623, %v619
        %v625 = vpop.permute.xlu0 %624
        %628 = vset.pattern.permute.xlu0 0
        %629 = vperm.xlu0 %628, %v620
        %v630 = vpop.permute.xlu0 %629
        %633 = vset.pattern.permute.xlu0 0
        %634 = vperm.xlu0 %633, %v621
        %v635 = vpop.permute.xlu0 %634
        %v637 = vadd.f32 %v613, %v625
        %v638 = vadd.f32 %v614, %v625
        %v639 = vadd.f32 %v615, %v630
        %v640 = vadd.f32 %v616, %v630
        %v641 = vadd.f32 %v617, %v635
        %v642 = vadd.f32 %v618, %v635
        %v643 = vxor.u32 %v639, 2147483648
        %v644 = vxor.u32 %v640, 2147483648
        %v645 = vmul.f32 %v643, 1.442695
        %v646 = vpow.pop %v645
        %v647 = vmul.f32 %v644, 1.442695
        %v648 = vpow.pop %v647
        %v649 = vadd.f32 %v646, 1.0
        %v650 = vadd.f32 %v648, 1.0
        %v651 = vrcp.pop %v649
        %v652 = vmul.f32 1.0, %v651
        %v653 = vrcp.pop %v650
        %v654 = vmul.f32 1.0, %v653
        %v655 = vmul.f32 %v637, %v652
        %v656 = vmul.f32 %v638, %v654
        %v657 = vlaneseq
        %v658 = vand.u32 %v657, 127
        %v659 = vadd.s32 %v658, 128
        %s660 = smul.u32 %s26, 128
        %s661 = ssub.s32 4, %s660
        %v662 = vstv %s661
        %vm663 = vcmp.ge.s32.totalorder %v658, %v662
        %vm664 = vcmp.ge.s32.totalorder %v659, %v662
        %v665 = vsel %vm663, 1, 0
        %v666 = vsel %vm664, 1, 0
        %vm667 = vcmp.eq.s32.totalorder %v665, 1
        %vm668 = vcmp.eq.s32.totalorder %v666, 1
        %v669 = vsel %vm667, %v655, 0.0
        %v670 = vsel %vm668, %v656, 0.0
        %v671 = vsel %vm667, %v639, 0.0
        %v672 = vsel %vm668, %v640, 0.0
        %v673 = vld [vmem:[%s2] sm:$0xff]
        %v674 = vld [vmem:[%s3] sm:$0xff]
        %s675 = scalar_lea.vmem %s2, 8
        %v676 = vld [vmem:[%s675] sm:$0xff]
        %679 = vrot.lane.b32.xlu0 %v669, 126
        %v680 = vpop.permute.xlu0 %679
        %681 = vrot.lane.b32.xlu0 %v670, 126
        %v682 = vpop.permute.xlu0 %681
        %v683 = vsel %vm320, %v680, %v682
        %v686 = vsel %vm324, %v676, 0
        %688 = vmatprep.subr.mxu0 0.0
        %689 = vmatpush1.msra.mxu0 %v683
        %690 = vmatprep.subr.mxu0 0.0
        %691 = vmatpush1.msra.mxu0 0.0
        %692 = vmatprep.subr.mxu0 0.0
        %693 = vmatpush1.msra.mxu0 0.0
        %694 = vmatprep.subr.mxu0 0.0
        %695 = vmatpush1.msra.mxu0 0.0
        %696 = vmatprep.subr.mxu0 0.0
        %697 = vmatpush1.msra.mxu0 0.0
        %698 = vmatprep.subr.mxu0 0.0
        %699 = vmatpush1.msra.mxu0 0.0
        %700 = vmatprep.subr.mxu0 0.0
        %701 = vmatpush1.msra.mxu0 0.0
        %702 = vmatprep.subr.mxu0 0.0
        %703 = vmatpush1.msra.mxu0 0.0
        %704 = vmatprep.subr.mxu0 0.0
        %705 = vmatpush1.msra.mxu0 0.0
        %706 = vmatprep.subr.mxu0 0.0
        %707 = vmatpush1.msra.mxu0 0.0
        %708 = vmatprep.subr.mxu0 0.0
        %709 = vmatpush1.msra.mxu0 0.0
        %710 = vmatprep.subr.mxu0 0.0
        %711 = vmatpush1.msra.mxu0 0.0
        %712 = vmatprep.subr.mxu0 0.0
        %713 = vmatpush1.msra.mxu0 0.0
        %714 = vmatprep.subr.mxu0 0.0
        %715 = vmatpush1.msra.mxu0 0.0
        %716 = vmatprep.subr.mxu0 0.0
        %717 = vmatpush1.msra.mxu0 0.0
        %718 = vmatprep.subr.mxu0 0.0
        %719 = vmatpush1.msra.mxu0 0.0
        %720 = vmatprep.subr.mxu0 0.0
        %721 = vmatpush1.msra.mxu0 0.0
        %722 = vmatprep.subr.mxu0 0.0
        %723 = vmatpush1.msra.mxu0 0.0
        %724 = vmatprep.subr.mxu0 0.0
        %725 = vmatpush1.msra.mxu0 0.0
        %726 = vmatprep.subr.mxu0 0.0
        %727 = vmatpush1.msra.mxu0 0.0
        %728 = vmatprep.subr.mxu0 0.0
        %729 = vmatpush1.msra.mxu0 0.0
        %730 = vmatprep.subr.mxu0 0.0
        %731 = vmatpush1.msra.mxu0 0.0
        %732 = vmatprep.subr.mxu0 0.0
        %733 = vmatpush1.msra.mxu0 0.0
        %734 = vmatprep.subr.mxu0 0.0
        %735 = vmatpush1.msra.mxu0 0.0
        %736 = vmatprep.subr.mxu0 0.0
        %737 = vmatpush1.msra.mxu0 0.0
        %738 = vmatprep.subr.mxu0 0.0
        %739 = vmatpush1.msra.mxu0 0.0
        %740 = vmatprep.subr.mxu0 0.0
        %741 = vmatpush1.msra.mxu0 0.0
        %742 = vmatprep.subr.mxu0 0.0
        %743 = vmatpush1.msra.mxu0 0.0
        %744 = vmatprep.subr.mxu0 0.0
        %745 = vmatpush1.msra.mxu0 0.0
        %746 = vmatprep.subr.mxu0 0.0
        %747 = vmatpush1.msra.mxu0 0.0
        %748 = vmatprep.subr.mxu0 0.0
        %749 = vmatpush1.msra.mxu0 0.0
        %750 = vmatprep.subr.mxu0 0.0
        %751 = vmatpush1.msra.mxu0 0.0
        %752 = vmatprep.mubr.f32.mxu0 0.0
        %753 = vmatmul.mubr.f32.gmra.mrb[0].mxu0 %v686
        %v754 = vpop.f32.mrb[0].mxu0
        %v755 = vadd.f32 0.0, %v754
        %v756 = vpop.f32.mrb[0].mxu0
        %757 = vdwg.mxu0
        %v759 = vsel %vm324, %v673, 0
        %761 = vmatprep.subr.mxu0 0.0
        %762 = vmatpush1.msra.mxu0 %v669
        %763 = vmatprep.subr.mxu0 0.0
        %764 = vmatpush1.msra.mxu0 0.0
        %765 = vmatprep.subr.mxu0 0.0
        %766 = vmatpush1.msra.mxu0 0.0
        %767 = vmatprep.subr.mxu0 0.0
        %768 = vmatpush1.msra.mxu0 0.0
        %769 = vmatprep.subr.mxu0 0.0
        %770 = vmatpush1.msra.mxu0 0.0
        %771 = vmatprep.subr.mxu0 0.0
        %772 = vmatpush1.msra.mxu0 0.0
        %773 = vmatprep.subr.mxu0 0.0
        %774 = vmatpush1.msra.mxu0 0.0
        %775 = vmatprep.subr.mxu0 0.0
        %776 = vmatpush1.msra.mxu0 0.0
        %777 = vmatprep.subr.mxu0 0.0
        %778 = vmatpush1.msra.mxu0 0.0
        %779 = vmatprep.subr.mxu0 0.0
        %780 = vmatpush1.msra.mxu0 0.0
        %781 = vmatprep.subr.mxu0 0.0
        %782 = vmatpush1.msra.mxu0 0.0
        %783 = vmatprep.subr.mxu0 0.0
        %784 = vmatpush1.msra.mxu0 0.0
        %785 = vmatprep.subr.mxu0 0.0
        %786 = vmatpush1.msra.mxu0 0.0
        %787 = vmatprep.subr.mxu0 0.0
        %788 = vmatpush1.msra.mxu0 0.0
        %789 = vmatprep.subr.mxu0 0.0
        %790 = vmatpush1.msra.mxu0 0.0
        %791 = vmatprep.subr.mxu0 0.0
        %792 = vmatpush1.msra.mxu0 0.0
        %793 = vmatprep.subr.mxu0 0.0
        %794 = vmatpush1.msra.mxu0 0.0
        %795 = vmatprep.subr.mxu0 0.0
        %796 = vmatpush1.msra.mxu0 0.0
        %797 = vmatprep.subr.mxu0 0.0
        %798 = vmatpush1.msra.mxu0 0.0
        %799 = vmatprep.subr.mxu0 0.0
        %800 = vmatpush1.msra.mxu0 0.0
        %801 = vmatprep.subr.mxu0 0.0
        %802 = vmatpush1.msra.mxu0 0.0
        %803 = vmatprep.subr.mxu0 0.0
        %804 = vmatpush1.msra.mxu0 0.0
        %805 = vmatprep.subr.mxu0 0.0
        %806 = vmatpush1.msra.mxu0 0.0
        %807 = vmatprep.subr.mxu0 0.0
        %808 = vmatpush1.msra.mxu0 0.0
        %809 = vmatprep.subr.mxu0 0.0
        %810 = vmatpush1.msra.mxu0 0.0
        %811 = vmatprep.subr.mxu0 0.0
        %812 = vmatpush1.msra.mxu0 0.0
        %813 = vmatprep.subr.mxu0 0.0
        %814 = vmatpush1.msra.mxu0 0.0
        %815 = vmatprep.subr.mxu0 0.0
        %816 = vmatpush1.msra.mxu0 0.0
        %817 = vmatprep.subr.mxu0 0.0
        %818 = vmatpush1.msra.mxu0 0.0
        %819 = vmatprep.subr.mxu0 0.0
        %820 = vmatpush1.msra.mxu0 0.0
        %821 = vmatprep.subr.mxu0 0.0
        %822 = vmatpush1.msra.mxu0 0.0
        %823 = vmatprep.subr.mxu0 0.0
        %824 = vmatpush1.msra.mxu0 0.0
        %825 = vmatprep.mubr.f32.mxu0 0.0
        %826 = vmatmul.mubr.f32.gmra.mrb[0].mxu0 %v759
        %v827 = vpop.f32.mrb[0].mxu0
        %v828 = vadd.f32 %v755, %v827
        %v829 = vpop.f32.mrb[0].mxu0
        %830 = vdwg.mxu0
        %s831 = scalar_lea.vmem %s3, 8
        %v832 = vld [vmem:[%s831] sm:$0xff]
        %835 = vrot.lane.b32.xlu0 %v671, 126
        %v836 = vpop.permute.xlu0 %835
        %837 = vrot.lane.b32.xlu0 %v672, 126
        %v838 = vpop.permute.xlu0 %837
        %v839 = vsel %vm320, %v836, %v838
        %v842 = vsel %vm324, %v832, 0
        %844 = vmatprep.subr.mxu0 0.0
        %845 = vmatpush1.msra.mxu0 %v839
        %846 = vmatprep.subr.mxu0 0.0
        %847 = vmatpush1.msra.mxu0 0.0
        %848 = vmatprep.subr.mxu0 0.0
        %849 = vmatpush1.msra.mxu0 0.0
        %850 = vmatprep.subr.mxu0 0.0
        %851 = vmatpush1.msra.mxu0 0.0
        %852 = vmatprep.subr.mxu0 0.0
        %853 = vmatpush1.msra.mxu0 0.0
        %854 = vmatprep.subr.mxu0 0.0
        %855 = vmatpush1.msra.mxu0 0.0
        %856 = vmatprep.subr.mxu0 0.0
        %857 = vmatpush1.msra.mxu0 0.0
        %858 = vmatprep.subr.mxu0 0.0
        %859 = vmatpush1.msra.mxu0 0.0
        %860 = vmatprep.subr.mxu0 0.0
        %861 = vmatpush1.msra.mxu0 0.0
        %862 = vmatprep.subr.mxu0 0.0
        %863 = vmatpush1.msra.mxu0 0.0
        %864 = vmatprep.subr.mxu0 0.0
        %865 = vmatpush1.msra.mxu0 0.0
        %866 = vmatprep.subr.mxu0 0.0
        %867 = vmatpush1.msra.mxu0 0.0
        %868 = vmatprep.subr.mxu0 0.0
        %869 = vmatpush1.msra.mxu0 0.0
        %870 = vmatprep.subr.mxu0 0.0
        %871 = vmatpush1.msra.mxu0 0.0
        %872 = vmatprep.subr.mxu0 0.0
        %873 = vmatpush1.msra.mxu0 0.0
        %874 = vmatprep.subr.mxu0 0.0
        %875 = vmatpush1.msra.mxu0 0.0
        %876 = vmatprep.subr.mxu0 0.0
        %877 = vmatpush1.msra.mxu0 0.0
        %878 = vmatprep.subr.mxu0 0.0
        %879 = vmatpush1.msra.mxu0 0.0
        %880 = vmatprep.subr.mxu0 0.0
        %881 = vmatpush1.msra.mxu0 0.0
        %882 = vmatprep.subr.mxu0 0.0
        %883 = vmatpush1.msra.mxu0 0.0
        %884 = vmatprep.subr.mxu0 0.0
        %885 = vmatpush1.msra.mxu0 0.0
        %886 = vmatprep.subr.mxu0 0.0
        %887 = vmatpush1.msra.mxu0 0.0
        %888 = vmatprep.subr.mxu0 0.0
        %889 = vmatpush1.msra.mxu0 0.0
        %890 = vmatprep.subr.mxu0 0.0
        %891 = vmatpush1.msra.mxu0 0.0
        %892 = vmatprep.subr.mxu0 0.0
        %893 = vmatpush1.msra.mxu0 0.0
        %894 = vmatprep.subr.mxu0 0.0
        %895 = vmatpush1.msra.mxu0 0.0
        %896 = vmatprep.subr.mxu0 0.0
        %897 = vmatpush1.msra.mxu0 0.0
        %898 = vmatprep.subr.mxu0 0.0
        %899 = vmatpush1.msra.mxu0 0.0
        %900 = vmatprep.subr.mxu0 0.0
        %901 = vmatpush1.msra.mxu0 0.0
        %902 = vmatprep.subr.mxu0 0.0
        %903 = vmatpush1.msra.mxu0 0.0
        %904 = vmatprep.subr.mxu0 0.0
        %905 = vmatpush1.msra.mxu0 0.0
        %906 = vmatprep.subr.mxu0 0.0
        %907 = vmatpush1.msra.mxu0 0.0
        %908 = vmatprep.mubr.f32.mxu0 0.0
        %909 = vmatmul.mubr.f32.gmra.mrb[0].mxu0 %v842
        %v910 = vpop.f32.mrb[0].mxu0
        %v911 = vadd.f32 0.0, %v910
        %v912 = vpop.f32.mrb[0].mxu0
        %913 = vdwg.mxu0
        %v915 = vsel %vm324, %v674, 0
        %917 = vmatprep.subr.mxu0 0.0
        %918 = vmatpush1.msra.mxu0 %v671
        %919 = vmatprep.subr.mxu0 0.0
        %920 = vmatpush1.msra.mxu0 0.0
        %921 = vmatprep.subr.mxu0 0.0
        %922 = vmatpush1.msra.mxu0 0.0
        %923 = vmatprep.subr.mxu0 0.0
        %924 = vmatpush1.msra.mxu0 0.0
        %925 = vmatprep.subr.mxu0 0.0
        %926 = vmatpush1.msra.mxu0 0.0
        %927 = vmatprep.subr.mxu0 0.0
        %928 = vmatpush1.msra.mxu0 0.0
        %929 = vmatprep.subr.mxu0 0.0
        %930 = vmatpush1.msra.mxu0 0.0
        %931 = vmatprep.subr.mxu0 0.0
        %932 = vmatpush1.msra.mxu0 0.0
        %933 = vmatprep.subr.mxu0 0.0
        %934 = vmatpush1.msra.mxu0 0.0
        %935 = vmatprep.subr.mxu0 0.0
        %936 = vmatpush1.msra.mxu0 0.0
        %937 = vmatprep.subr.mxu0 0.0
        %938 = vmatpush1.msra.mxu0 0.0
        %939 = vmatprep.subr.mxu0 0.0
        %940 = vmatpush1.msra.mxu0 0.0
        %941 = vmatprep.subr.mxu0 0.0
        %942 = vmatpush1.msra.mxu0 0.0
        %943 = vmatprep.subr.mxu0 0.0
        %944 = vmatpush1.msra.mxu0 0.0
        %945 = vmatprep.subr.mxu0 0.0
        %946 = vmatpush1.msra.mxu0 0.0
        %947 = vmatprep.subr.mxu0 0.0
        %948 = vmatpush1.msra.mxu0 0.0
        %949 = vmatprep.subr.mxu0 0.0
        %950 = vmatpush1.msra.mxu0 0.0
        %951 = vmatprep.subr.mxu0 0.0
        %952 = vmatpush1.msra.mxu0 0.0
        %953 = vmatprep.subr.mxu0 0.0
        %954 = vmatpush1.msra.mxu0 0.0
        %955 = vmatprep.subr.mxu0 0.0
        %956 = vmatpush1.msra.mxu0 0.0
        %957 = vmatprep.subr.mxu0 0.0
        %958 = vmatpush1.msra.mxu0 0.0
        %959 = vmatprep.subr.mxu0 0.0
        %960 = vmatpush1.msra.mxu0 0.0
        %961 = vmatprep.subr.mxu0 0.0
        %962 = vmatpush1.msra.mxu0 0.0
        %963 = vmatprep.subr.mxu0 0.0
        %964 = vmatpush1.msra.mxu0 0.0
        %965 = vmatprep.subr.mxu0 0.0
        %966 = vmatpush1.msra.mxu0 0.0
        %967 = vmatprep.subr.mxu0 0.0
        %968 = vmatpush1.msra.mxu0 0.0
        %969 = vmatprep.subr.mxu0 0.0
        %970 = vmatpush1.msra.mxu0 0.0
        %971 = vmatprep.subr.mxu0 0.0
        %972 = vmatpush1.msra.mxu0 0.0
        %973 = vmatprep.subr.mxu0 0.0
        %974 = vmatpush1.msra.mxu0 0.0
        %975 = vmatprep.subr.mxu0 0.0
        %976 = vmatpush1.msra.mxu0 0.0
        %977 = vmatprep.subr.mxu0 0.0
        %978 = vmatpush1.msra.mxu0 0.0
        %979 = vmatprep.subr.mxu0 0.0
        %980 = vmatpush1.msra.mxu0 0.0
        %981 = vmatprep.mubr.f32.mxu0 0.0
        %982 = vmatmul.mubr.f32.gmra.mrb[0].mxu0 %v915
        %v983 = vpop.f32.mrb[0].mxu0
        %v984 = vadd.f32 %v911, %v983
        %v985 = vpop.f32.mrb[0].mxu0
        %986 = vdwg.mxu0
        %s987 = scalar_lea.vmem %s2, 16
        %v988 = vld [vmem:[%s987] sm:$0xff]
        %989 = vrot.lane.b32.xlu0 %v669, 124
        %v990 = vpop.permute.xlu0 %989
        %991 = vrot.lane.b32.xlu0 %v670, 124
        %v992 = vpop.permute.xlu0 %991
        %v993 = vsel %vm517, %v990, %v992
        %v996 = vsel %vm324, %v988, 0
        %998 = vmatprep.subr.mxu0 0.0
        %999 = vmatpush1.msra.mxu0 %v993
        %1000 = vmatprep.subr.mxu0 0.0
        %1001 = vmatpush1.msra.mxu0 0.0
        %1002 = vmatprep.subr.mxu0 0.0
        %1003 = vmatpush1.msra.mxu0 0.0
        %1004 = vmatprep.subr.mxu0 0.0
        %1005 = vmatpush1.msra.mxu0 0.0
        %1006 = vmatprep.subr.mxu0 0.0
        %1007 = vmatpush1.msra.mxu0 0.0
        %1008 = vmatprep.subr.mxu0 0.0
        %1009 = vmatpush1.msra.mxu0 0.0
        %1010 = vmatprep.subr.mxu0 0.0
        %1011 = vmatpush1.msra.mxu0 0.0
        %1012 = vmatprep.subr.mxu0 0.0
        %1013 = vmatpush1.msra.mxu0 0.0
        %1014 = vmatprep.subr.mxu0 0.0
        %1015 = vmatpush1.msra.mxu0 0.0
        %1016 = vmatprep.subr.mxu0 0.0
        %1017 = vmatpush1.msra.mxu0 0.0
        %1018 = vmatprep.subr.mxu0 0.0
        %1019 = vmatpush1.msra.mxu0 0.0
        %1020 = vmatprep.subr.mxu0 0.0
        %1021 = vmatpush1.msra.mxu0 0.0
        %1022 = vmatprep.subr.mxu0 0.0
        %1023 = vmatpush1.msra.mxu0 0.0
        %1024 = vmatprep.subr.mxu0 0.0
        %1025 = vmatpush1.msra.mxu0 0.0
        %1026 = vmatprep.subr.mxu0 0.0
        %1027 = vmatpush1.msra.mxu0 0.0
        %1028 = vmatprep.subr.mxu0 0.0
        %1029 = vmatpush1.msra.mxu0 0.0
        %1030 = vmatprep.subr.mxu0 0.0
        %1031 = vmatpush1.msra.mxu0 0.0
        %1032 = vmatprep.subr.mxu0 0.0
        %1033 = vmatpush1.msra.mxu0 0.0
        %1034 = vmatprep.subr.mxu0 0.0
        %1035 = vmatpush1.msra.mxu0 0.0
        %1036 = vmatprep.subr.mxu0 0.0
        %1037 = vmatpush1.msra.mxu0 0.0
        %1038 = vmatprep.subr.mxu0 0.0
        %1039 = vmatpush1.msra.mxu0 0.0
        %1040 = vmatprep.subr.mxu0 0.0
        %1041 = vmatpush1.msra.mxu0 0.0
        %1042 = vmatprep.subr.mxu0 0.0
        %1043 = vmatpush1.msra.mxu0 0.0
        %1044 = vmatprep.subr.mxu0 0.0
        %1045 = vmatpush1.msra.mxu0 0.0
        %1046 = vmatprep.subr.mxu0 0.0
        %1047 = vmatpush1.msra.mxu0 0.0
        %1048 = vmatprep.subr.mxu0 0.0
        %1049 = vmatpush1.msra.mxu0 0.0
        %1050 = vmatprep.subr.mxu0 0.0
        %1051 = vmatpush1.msra.mxu0 0.0
        %1052 = vmatprep.subr.mxu0 0.0
        %1053 = vmatpush1.msra.mxu0 0.0
        %1054 = vmatprep.subr.mxu0 0.0
        %1055 = vmatpush1.msra.mxu0 0.0
        %1056 = vmatprep.subr.mxu0 0.0
        %1057 = vmatpush1.msra.mxu0 0.0
        %1058 = vmatprep.subr.mxu0 0.0
        %1059 = vmatpush1.msra.mxu0 0.0
        %1060 = vmatprep.subr.mxu0 0.0
        %1061 = vmatpush1.msra.mxu0 0.0
        %1062 = vmatprep.mubr.f32.mxu0 0.0
        %1063 = vmatmul.mubr.f32.gmra.mrb[0].mxu0 %v996
        %v1064 = vpop.f32.mrb[0].mxu0
        %v1065 = vadd.f32 0.0, %v1064
        %v1066 = vpop.f32.mrb[0].mxu0
        %1067 = vdwg.mxu0
        %v1068 = vadd.f32 %v828, %v1065
        %s1069 = scalar_lea.vmem %s3, 16
        %v1070 = vld [vmem:[%s1069] sm:$0xff]
        %1071 = vrot.lane.b32.xlu0 %v671, 124
        %v1072 = vpop.permute.xlu0 %1071
        %1073 = vrot.lane.b32.xlu0 %v672, 124
        %v1074 = vpop.permute.xlu0 %1073
        %v1075 = vsel %vm517, %v1072, %v1074
        %v1078 = vsel %vm324, %v1070, 0
        %1080 = vmatprep.subr.mxu0 0.0
        %1081 = vmatpush1.msra.mxu0 %v1075
        %1082 = vmatprep.subr.mxu0 0.0
        %1083 = vmatpush1.msra.mxu0 0.0
        %1084 = vmatprep.subr.mxu0 0.0
        %1085 = vmatpush1.msra.mxu0 0.0
        %1086 = vmatprep.subr.mxu0 0.0
        %1087 = vmatpush1.msra.mxu0 0.0
        %1088 = vmatprep.subr.mxu0 0.0
        %1089 = vmatpush1.msra.mxu0 0.0
        %1090 = vmatprep.subr.mxu0 0.0
        %1091 = vmatpush1.msra.mxu0 0.0
        %1092 = vmatprep.subr.mxu0 0.0
        %1093 = vmatpush1.msra.mxu0 0.0
        %1094 = vmatprep.subr.mxu0 0.0
        %1095 = vmatpush1.msra.mxu0 0.0
        %1096 = vmatprep.subr.mxu0 0.0
        %1097 = vmatpush1.msra.mxu0 0.0
        %1098 = vmatprep.subr.mxu0 0.0
        %1099 = vmatpush1.msra.mxu0 0.0
        %1100 = vmatprep.subr.mxu0 0.0
        %1101 = vmatpush1.msra.mxu0 0.0
        %1102 = vmatprep.subr.mxu0 0.0
        %1103 = vmatpush1.msra.mxu0 0.0
        %1104 = vmatprep.subr.mxu0 0.0
        %1105 = vmatpush1.msra.mxu0 0.0
        %1106 = vmatprep.subr.mxu0 0.0
        %1107 = vmatpush1.msra.mxu0 0.0
        %1108 = vmatprep.subr.mxu0 0.0
        %1109 = vmatpush1.msra.mxu0 0.0
        %1110 = vmatprep.subr.mxu0 0.0
        %1111 = vmatpush1.msra.mxu0 0.0
        %1112 = vmatprep.subr.mxu0 0.0
        %1113 = vmatpush1.msra.mxu0 0.0
        %1114 = vmatprep.subr.mxu0 0.0
        %1115 = vmatpush1.msra.mxu0 0.0
        %1116 = vmatprep.subr.mxu0 0.0
        %1117 = vmatpush1.msra.mxu0 0.0
        %1118 = vmatprep.subr.mxu0 0.0
        %1119 = vmatpush1.msra.mxu0 0.0
        %1120 = vmatprep.subr.mxu0 0.0
        %1121 = vmatpush1.msra.mxu0 0.0
        %1122 = vmatprep.subr.mxu0 0.0
        %1123 = vmatpush1.msra.mxu0 0.0
        %1124 = vmatprep.subr.mxu0 0.0
        %1125 = vmatpush1.msra.mxu0 0.0
        %1126 = vmatprep.subr.mxu0 0.0
        %1127 = vmatpush1.msra.mxu0 0.0
        %1128 = vmatprep.subr.mxu0 0.0
        %1129 = vmatpush1.msra.mxu0 0.0
        %1130 = vmatprep.subr.mxu0 0.0
        %1131 = vmatpush1.msra.mxu0 0.0
        %1132 = vmatprep.subr.mxu0 0.0
        %1133 = vmatpush1.msra.mxu0 0.0
        %1134 = vmatprep.subr.mxu0 0.0
        %1135 = vmatpush1.msra.mxu0 0.0
        %1136 = vmatprep.subr.mxu0 0.0
        %1137 = vmatpush1.msra.mxu0 0.0
        %1138 = vmatprep.subr.mxu0 0.0
        %1139 = vmatpush1.msra.mxu0 0.0
        %1140 = vmatprep.subr.mxu0 0.0
        %1141 = vmatpush1.msra.mxu0 0.0
        %1142 = vmatprep.subr.mxu0 0.0
        %1143 = vmatpush1.msra.mxu0 0.0
        %1144 = vmatprep.mubr.f32.mxu0 0.0
        %1145 = vmatmul.mubr.f32.gmra.mrb[0].mxu0 %v1078
        %v1146 = vpop.f32.mrb[0].mxu0
        %v1147 = vadd.f32 0.0, %v1146
        %v1148 = vpop.f32.mrb[0].mxu0
        %1149 = vdwg.mxu0
        %v1150 = vadd.f32 %v984, %v1147
        %v1151 = vld [vmem:[%s5] sm:$0xff]
        %1153 = vset.pattern.permute.xlu0 0
        %1154 = vperm.xlu0 %1153, %v1151
        %v1155 = vpop.permute.xlu0 %1154
        %v1157 = vadd.f32 %v1068, %v1155
        %v1158 = vld [vmem:[%s6] sm:$0xff]
        %1160 = vset.pattern.permute.xlu0 0
        %1161 = vperm.xlu0 %1160, %v1158
        %v1162 = vpop.permute.xlu0 %1161
        %v1164 = vadd.f32 %v1150, %v1162
        %v1165 = vxor.u32 %v1164, 2147483648
        %v1166 = vmul.f32 %v1165, 1.442695
        %v1167 = vpow.pop %v1166
        %v1168 = vadd.f32 %v1167, 1.0
        %v1169 = vrcp.pop %v1168
        %v1170 = vmul.f32 1.0, %v1169
        %v1171 = vmul.f32 %v1157, %v1170
        %1174 = vrot.lane.b32.xlu0 %v641, 124
        %v1175 = vpop.permute.xlu0 %1174
        %1176 = vrot.lane.b32.xlu0 %v642, 124
        %v1177 = vpop.permute.xlu0 %1176
        %v1178 = vsel %vm517, %v1175, %v1177
        %v1180 = vadd.f32 %v1171, %v1178
        %1181 = vst [vmem:[%s295] sm:$0xff] %v1180
        %s1182 = sand.u32 %s197, 1
        %s1183 = scalar_lea.sflag [#allocation3], %s1182
        %s1184 = sand.u32 %s197, 1
        %s1185 = smul.addr %s1184, 8
        %s1186 = scalar_lea.vmem [#allocation2], %s1185
        // Predicated region
        $region49: #{gated_temporal_block_last_sep.1} parent=47 // pred_check
          %p1187 = pneg %p207
        $region50: #{gated_temporal_block_last_sep.1} parent=47 // pred_check_branch
          %1189 = sbr.rel (%p1187) target = $region52
        $region51: #{gated_temporal_block_last_sep.1} parent=47 // pred_region
          %s1191 = ssub.s32 128, 128
          %1192 = vsyncadd %s1183, %s1191
          %s1193 = sadd.s32 %s26, %s25
          %s1194 = smul.addr %s1193, 128
          %s1195 = scalar_lea.hbm %s7, %s1194
          %s1197 = sshll.u32 %s1186, 4
          %s1198 = int_to_ptr.vmem [resolvable:$true] %s1197
          %1200 = dma.vmem_to_hbm [thread:$0]  %s1198, 128, %s1195, %s1183
        $region52: #{gated_temporal_block_last_sep.1} parent=47 // pred_fallthru
          _
      $region48: #{gated_temporal_block_last_sep.1} parent=5 // pred_fallthru
        _
      %p1201 = scmp.le.s32.totalorder 2, %s16
      // Predicated region
      $region53: #{gated_temporal_block_last_sep.1} parent=5 // pred_check
        %p1202 = pneg %p1201
      $region54: #{gated_temporal_block_last_sep.1} parent=5 // pred_check_branch
        %1204 = sbr.rel (%p1202) target = $region56
      $region55: #{gated_temporal_block_last_sep.1} parent=5 // pred_region
        %s1205 = ssub.s32 %s16, 2
        // Predicated region
        $region57: #{gated_temporal_block_last_sep.1} parent=55 // pred_check
          %p1206 = pneg %p213
        $region58: #{gated_temporal_block_last_sep.1} parent=55 // pred_check_branch
          %1208 = sbr.rel (%p1206) target = $region60
        $region59: #{gated_temporal_block_last_sep.1} parent=55 // pred_region
          %s1209 = sand.u32 %s198, 1
          %s1210 = scalar_lea.sflag [#allocation3], %s1209
          %s1211 = sand.u32 %s198, 1
          %s1212 = smul.addr %s1211, 8
          %s1213 = scalar_lea.vmem [#allocation2], %s1212
          %1214 = dma.done %s1210, 128
        $region60: #{gated_temporal_block_last_sep.1} parent=55 // pred_fallthru
          _
      $region56: #{gated_temporal_block_last_sep.1} parent=5 // pred_fallthru
        _
    $region6: #{gated_temporal_block_last_sep.1} parent=1 // loop_footer
      %s20 = sadd.s32 1, %s16
    $region7: #{gated_temporal_block_last_sep.1} parent=1 // loop_footer_branch
      %15 = sbr.rel target = $region3
    $region8: #{gated_temporal_block_last_sep.1} parent=1 // loop_exit
      _
    %1215 = vsyncpa [#allocation3], 1
    %s1216 = scalar_lea.sflag [#allocation3], 1
    %1217 = vsyncpa %s1216, 1

</llo_original>
